<compile_context>
chip_gen: v7x
topology: tpu7x:2x2x1
jax: 0.10.0
libtpu: 0.0.40
codegen_flags: <defaults>
</compile_context>

<pallas_src>
import functools

import jax
import jax.numpy as jnp
from jax.experimental import pallas as pl
from jax.experimental.pallas import tpu as pltpu


def _round_up(n, m):
    return (n + m - 1) // m * m


def _sigmoid_via_tanh(x):
    # sigmoid(x) == 0.5*tanh(0.5*x) + 0.5 : one EUP op instead of exp + reciprocal.
    return 0.5 * jnp.tanh(0.5 * x) + 0.5


def _odelstm_kernel(x_ref, h_ref, c_ref, ts_ref,
                    wg_ref, bg_ref,
                    w1_ref, b1_ref, w2_ref, b2_ref,
                    w21_ref, b2w1_ref,
                    h_out_ref, c_out_ref, *, mm_dtype):
    H = h_ref.shape[-1]

    x = x_ref[...]                       # (B, I)  f32
    h = h_ref[...]                       # (B, H)  f32
    c = c_ref[...]                       # (B, H)  f32
    ts = ts_ref[...]                     # (B, 1)  f32

    def mm(a, w_ref):
        # MXU matmul: operands in mm_dtype (f32 or bf16), accumulate in f32.
        return jnp.dot(a.astype(mm_dtype), w_ref[...],
                       preferred_element_type=jnp.float32)

    # ----- LSTMCell: single fused matmul over [x, h] with stacked weights -----
    xh = jnp.concatenate([x.astype(mm_dtype), h.astype(mm_dtype)], axis=-1)
    gates = (jnp.dot(xh, wg_ref[...], preferred_element_type=jnp.float32)
             + bg_ref[...])              # (B, 4H), PyTorch gate order i, f, g, o

    i_g = _sigmoid_via_tanh(gates[:, 0 * H:1 * H])
    f_g = _sigmoid_via_tanh(gates[:, 1 * H:2 * H])
    g_g = jnp.tanh(gates[:, 2 * H:3 * H])
    o_g = _sigmoid_via_tanh(gates[:, 3 * H:4 * H])

    new_c = f_g * c + i_g * g_g
    new_h = o_g * jnp.tanh(new_c)

    # ----- ODE part: 3 RK4 steps with delta_t = ts / 3 -----
    # f_node(y) = tanh(y@W1 + b1) @ W2 + b2.  With W21 = W2@W1, b2W1 = b2@W1:
    #   k_j @ W1 = z_j @ W21 + b2W1, so every stage only needs a W21 matmul;
    #   the W2 matmul is deferred to a single final (Σ zsum) @ W2.
    # u = y@W1 + b1 is carried across steps:
    #   u_new = u + dt/6 ⊙ (zsum @ W21) + dt ⊙ b2W1
    #   y_fin = y0 + dt/6 ⊙ ((Σ_s zsum_s) @ W2) + 3·dt ⊙ b2
    dt = ts * (1.0 / 3.0)                # (B, 1)
    half_dt = 0.5 * dt
    dt_sixth = dt * (1.0 / 6.0)

    b2w1 = b2w1_ref[...]                 # (1, H)
    hdt_b2w1 = half_dt * b2w1            # (B, H)  hoisted (loop invariant)
    dt_b2w1 = dt * b2w1                  # (B, H)  hoisted (loop invariant)

    u = mm(new_h, w1_ref) + b1_ref[...]  # (B, H)  carried pre-activation

    s_total = None
    for step in range(3):                # static unroll (fixed trip count)
        z1 = jnp.tanh(u)
        z1w = mm(z1, w21_ref)
        z2 = jnp.tanh(u + hdt_b2w1 + half_dt * z1w)
        z2w = mm(z2, w21_ref)
        z3 = jnp.tanh(u + hdt_b2w1 + half_dt * z2w)
        z3w = mm(z3, w21_ref)
        z4 = jnp.tanh(u + dt_b2w1 + dt * z3w)

        zsum = z1 + 2.0 * z2 + 2.0 * z3 + z4
        s_total = zsum if s_total is None else s_total + zsum

        if step < 2:                     # last step: no carry needed -> skip z4@W21
            z4w = mm(z4, w21_ref)
            u = u + dt_sixth * (z1w + 2.0 * z2w + 2.0 * z3w + z4w) + dt_b2w1

    y = new_h + dt_sixth * mm(s_total, w2_ref) + (3.0 * dt) * b2_ref[...]

    h_out_ref[...] = y.astype(h_out_ref.dtype)
    c_out_ref[...] = new_c.astype(c_out_ref.dtype)


def prepare_odelstm_params(params, mm_dtype=jnp.float32):
    """One-time parameter preparation (transpose / stack / W2@W1 precompute).

    Call once at init; do NOT call per timestep.  mm_dtype=jnp.bfloat16 selects the
    fast MXU path on v6e/v7x (elementwise math in the kernel stays f32).
    """
    f32 = jnp.float32
    wih_t = params["w_ih"].astype(f32).T               # (I, 4H)
    whh_t = params["w_hh"].astype(f32).T               # (H, 4H)
    w_gates = jnp.concatenate([wih_t, whh_t], axis=0)  # (I+H, 4H)
    b_gates = (params["b_ih"] + params["b_hh"]).astype(f32).reshape(1, -1)

    w1_t = params["f1_w"].astype(f32).T                # (H, H)
    w2_t = params["f2_w"].astype(f32).T                # (H, H)
    b1 = params["f1_b"].astype(f32).reshape(1, -1)     # (1, H)
    b2 = params["f2_b"].astype(f32).reshape(1, -1)     # (1, H)
    w21 = w2_t @ w1_t                                  # (H, H):  z @ W21 == (z@W2)@W1
    b2w1 = b2 @ w1_t                                   # (1, H)

    return {
        "w_gates": w_gates.astype(mm_dtype),
        "b_gates": b_gates,
        "w1": w1_t.astype(mm_dtype),
        "b1": b1,
        "w2": w2_t.astype(mm_dtype),
        "b2": b2,
        "w21": w21.astype(mm_dtype),
        "b2w1": b2w1,
        "mm_dtype": mm_dtype,
    }


def _cost_estimate(B, I, H, itemsize_w):
    # 1 gate matmul + 1 u matmul + 11 W21 matmuls + 1 final W2 matmul.
    flops = 2 * B * (I + H) * 4 * H + 13 * 2 * B * H * H
    # 3 sigmoids (1 tanh each) + 2 tanh in LSTM, 12 tanh in RK4.
    transcendentals = 17 * B * H
    bytes_io = 4 * (B * (I + 2 * H + 1) + 2 * B * H)                # f32 activations
    bytes_w = itemsize_w * ((I + H) * 4 * H + 3 * H * H) + 4 * (4 * H + 4 * H)
    return pl.CostEstimate(flops=int(flops),
                           transcendentals=int(transcendentals),
                           bytes_accessed=int(bytes_io + bytes_w))


def odelstm_cell_forward(x, h, c, ts, prep, *, block_b=256):
    """Pallas wrapper. x:(B,I), h/c:(B,H), ts:(B,). Returns (new_h, new_c) in f32."""
    B, H = h.shape
    I = x.shape[-1]
    mm_dtype = prep["mm_dtype"]

    x = x.astype(jnp.float32)
    h = h.astype(jnp.float32)
    c = c.astype(jnp.float32)
    ts2d = ts.reshape(-1, 1).astype(jnp.float32)        # ts.view(-1, 1)

    # Batch tiling: one block if small, else a 1-D grid over batch rows.
    if B <= block_b:
        blk = _round_up(max(B, 8), 8)
    else:
        blk = _round_up(block_b, 8)
    B_pad = _round_up(B, blk)
    if B_pad != B:
        pad = ((0, B_pad - B), (0, 0))
        x = jnp.pad(x, pad)
        h = jnp.pad(h, pad)
        c = jnp.pad(c, pad)
        ts2d = jnp.pad(ts2d, pad)
    grid = (B_pad // blk,)

    def batched(feat):
        return pl.BlockSpec((blk, feat), lambda i: (i, 0))

    def resident(arr):                                   # weights resident across grid
        return pl.BlockSpec(arr.shape, lambda i: (0, 0))

    kernel = functools.partial(_odelstm_kernel, mm_dtype=mm_dtype)
    w_itemsize = jnp.dtype(mm_dtype).itemsize

    new_h, new_c = pl.pallas_call(
        kernel,
        out_shape=(jax.ShapeDtypeStruct((B_pad, H), jnp.float32),
                   jax.ShapeDtypeStruct((B_pad, H), jnp.float32)),
        grid=grid,
        in_specs=[batched(I), batched(H), batched(H), batched(1),
                  resident(prep["w_gates"]), resident(prep["b_gates"]),
                  resident(prep["w1"]), resident(prep["b1"]),
                  resident(prep["w2"]), resident(prep["b2"]),
                  resident(prep["w21"]), resident(prep["b2w1"])],
        out_specs=(batched(H), batched(H)),
        compiler_params=pltpu.CompilerParams(
            dimension_semantics=("parallel",)),          # shard batch over v7x dual TCs
        cost_estimate=_cost_estimate(B_pad, I, H, w_itemsize),
    )(x, h, c, ts2d,
      prep["w_gates"], prep["b_gates"], prep["w1"], prep["b1"],
      prep["w2"], prep["b2"], prep["w21"], prep["b2w1"])

    if B_pad != B:
        new_h = new_h[:B]
        new_c = new_c[:B]
    return new_h, new_c


def _init_params(key, input_size, hidden_size):
    """Deterministic synthetic init (uniform(-k, k), k = 1/sqrt(hidden)), PyTorch-style."""
    k = 1.0 / jnp.sqrt(jnp.float32(hidden_size))
    keys = jax.random.split(key, 8)
    u = lambda kk, shape: jax.random.uniform(kk, shape, jnp.float32, -k, k)
    return {
        "w_ih": u(keys[0], (4 * hidden_size, input_size)),
        "w_hh": u(keys[1], (4 * hidden_size, hidden_size)),
        "b_ih": u(keys[2], (4 * hidden_size,)),
        "b_hh": u(keys[3], (4 * hidden_size,)),
        "f1_w": u(keys[4], (hidden_size, hidden_size)),
        "f1_b": u(keys[5], (hidden_size,)),
        "f2_w": u(keys[6], (hidden_size, hidden_size)),
        "f2_b": u(keys[7], (hidden_size,)),
    }


def _reference_forward(x, h, c, ts, p):
    """Pure-JAX reference replicating the PyTorch module (fixed_rk4)."""
    gates = x @ p["w_ih"].T + p["b_ih"] + h @ p["w_hh"].T + p["b_hh"]
    H = h.shape[-1]
    i = jax.nn.sigmoid(gates[:, :H])
    f = jax.nn.sigmoid(gates[:, H:2 * H])
    g = jnp.tanh(gates[:, 2 * H:3 * H])
    o = jax.nn.sigmoid(gates[:, 3 * H:])
    new_c = f * c + i * g
    new_h = o * jnp.tanh(new_c)

    def f_node(y):
        return jnp.tanh(y @ p["f1_w"].T + p["f1_b"]) @ p["f2_w"].T + p["f2_b"]

    dt = ts.reshape(-1, 1) * (1.0 / 3.0)
    y = new_h
    for _ in range(3):
        k1 = f_node(y)
        k2 = f_node(y + k1 * dt * 0.5)
        k3 = f_node(y + k2 * dt * 0.5)
        k4 = f_node(y + k3 * dt)
        y = y + dt * (k1 + 2 * k2 + 2 * k3 + k4) / 6.0
    return y, new_c


if __name__ == "__main__":
    input_size, hidden_size, batch = 16, 32, 8

    key = jax.random.PRNGKey(0)
    k_x, k_h, k_c, k_ts, k_p = jax.random.split(key, 5)

    x = jax.random.normal(k_x, (batch, input_size), jnp.float32)
    h = jax.random.normal(k_h, (batch, hidden_size), jnp.float32)
    c = jax.random.normal(k_c, (batch, hidden_size), jnp.float32)
    ts = jax.random.uniform(k_ts, (batch,), jnp.float32, 0.1, 1.0)

    params = _init_params(k_p, input_size, hidden_size)
    ref_h, ref_c = _reference_forward(x, h, c, ts, params)

    # 1) f32 MXU-operand path (exact module semantics; refactor is algebraically exact).
    prep32 = prepare_odelstm_params(params, mm_dtype=jnp.float32)
    new_h, new_c = odelstm_cell_forward(x, h, c, ts, prep32)
    jax.block_until_ready((new_h, new_c))
    assert jnp.allclose(new_h, ref_h, atol=1e-5, rtol=1e-5)
    assert jnp.allclose(new_c, ref_c, atol=1e-5, rtol=1e-5)

    # 2) bf16 MXU-operand path (fast path on v6e/v7x; elementwise math stays f32).
    prep16 = prepare_odelstm_params(params, mm_dtype=jnp.bfloat16)
    bh, bc = odelstm_cell_forward(x, h, c, ts, prep16)
    jax.block_until_ready((bh, bc))
    assert jnp.allclose(bh, ref_h, atol=5e-2, rtol=5e-2)
    assert jnp.allclose(bc, ref_c, atol=5e-2, rtol=5e-2)

    # 3) larger batch exercising the 1-D batch grid + padding (128-row tiles, v5e-friendly).
    B2 = 300
    k2 = jax.random.split(key, 4)
    x2 = jax.random.normal(k2[0], (B2, input_size), jnp.float32)
    h2 = jax.random.normal(k2[1], (B2, hidden_size), jnp.float32)
    c2 = jax.random.normal(k2[2], (B2, hidden_size), jnp.float32)
    ts2 = jax.random.uniform(k2[3], (B2,), jnp.float32, 0.1, 1.0)
    gh, gc = odelstm_cell_forward(x2, h2, c2, ts2, prep32, block_b=128)
    jax.block_until_ready((gh, gc))
    rh, rc = _reference_forward(x2, h2, c2, ts2, params)
    assert jnp.allclose(gh, rh, atol=1e-5, rtol=1e-5)
    assert jnp.allclose(gc, rc, atol=1e-5, rtol=1e-5)

    print("KERNEL_OK")
</pallas_src>

<mosaic_0001>
module attributes {stable_mosaic.version = 11 : i64} {
  func.func @_odelstm_kernel(%arg0: i32, %arg1: memref<8x16xf32, #tpu.memory_space<vmem>>, %arg2: memref<8x32xf32, #tpu.memory_space<vmem>>, %arg3: memref<8x32xf32, #tpu.memory_space<vmem>>, %arg4: memref<8x1xf32, #tpu.memory_space<vmem>>, %arg5: memref<48x128xf32, #tpu.memory_space<vmem>>, %arg6: memref<1x128xf32, #tpu.memory_space<vmem>>, %arg7: memref<32x32xf32, #tpu.memory_space<vmem>>, %arg8: memref<1x32xf32, #tpu.memory_space<vmem>>, %arg9: memref<32x32xf32, #tpu.memory_space<vmem>>, %arg10: memref<1x32xf32, #tpu.memory_space<vmem>>, %arg11: memref<32x32xf32, #tpu.memory_space<vmem>>, %arg12: memref<1x32xf32, #tpu.memory_space<vmem>>, %arg13: memref<8x32xf32, #tpu.memory_space<vmem>>, %arg14: memref<8x32xf32, #tpu.memory_space<vmem>>) attributes {dimension_semantics = [#tpu.dimension_semantics<parallel>], iteration_bounds = array<i64: 1>, scalar_prefetch = 0 : i64, scratch_operands = 0 : i64, tpu.core_type = #tpu.core_type<tc>, window_params = [{transform_indices = @transform_0, window_bounds = array<i64: 8, 16>}, {transform_indices = @transform_1, window_bounds = array<i64: 8, 32>}, {transform_indices = @transform_2, window_bounds = array<i64: 8, 32>}, {transform_indices = @transform_3, window_bounds = array<i64: 8, 1>}, {pipeline_mode = #tpu.pipeline_mode<synchronous>, transform_indices = @transform_4, window_bounds = array<i64: 48, 128>}, {pipeline_mode = #tpu.pipeline_mode<synchronous>, transform_indices = @transform_5, window_bounds = array<i64: 1, 128>}, {pipeline_mode = #tpu.pipeline_mode<synchronous>, transform_indices = @transform_6, window_bounds = array<i64: 32, 32>}, {pipeline_mode = #tpu.pipeline_mode<synchronous>, transform_indices = @transform_7, window_bounds = array<i64: 1, 32>}, {pipeline_mode = #tpu.pipeline_mode<synchronous>, transform_indices = @transform_8, window_bounds = array<i64: 32, 32>}, {pipeline_mode = #tpu.pipeline_mode<synchronous>, transform_indices = @transform_9, window_bounds = array<i64: 1, 32>}, {pipeline_mode = #tpu.pipeline_mode<synchronous>, transform_indices = @transform_10, window_bounds = array<i64: 32, 32>}, {pipeline_mode = #tpu.pipeline_mode<synchronous>, transform_indices = @transform_11, window_bounds = array<i64: 1, 32>}, {transform_indices = @transform_12, window_bounds = array<i64: 8, 32>}, {transform_indices = @transform_13, window_bounds = array<i64: 8, 32>}]} {
    %c0 = arith.constant 0 : index
    %c0_0 = arith.constant 0 : index
    %0 = vector.load %arg1[%c0, %c0_0] : memref<8x16xf32, #tpu.memory_space<vmem>>, vector<8x16xf32>
    %c0_1 = arith.constant 0 : index
    %c0_2 = arith.constant 0 : index
    %1 = vector.load %arg2[%c0_1, %c0_2] : memref<8x32xf32, #tpu.memory_space<vmem>>, vector<8x32xf32>
    %c0_3 = arith.constant 0 : index
    %c0_4 = arith.constant 0 : index
    %2 = vector.load %arg3[%c0_3, %c0_4] : memref<8x32xf32, #tpu.memory_space<vmem>>, vector<8x32xf32>
    %c0_5 = arith.constant 0 : index
    %c0_6 = arith.constant 0 : index
    %3 = vector.load %arg4[%c0_5, %c0_6] : memref<8x1xf32, #tpu.memory_space<vmem>>, vector<8x1xf32>
    %4 = tpu.concatenate %0, %1 in 1 : vector<8x16xf32>, vector<8x32xf32> -> vector<8x48xf32>
    %c0_7 = arith.constant 0 : index
    %c0_8 = arith.constant 0 : index
    %5 = vector.load %arg5[%c0_7, %c0_8] : memref<48x128xf32, #tpu.memory_space<vmem>>, vector<48x128xf32>
    %cst = arith.constant dense<0.000000e+00> : vector<8x128xf32>
    %6 = tpu.matmul %4, %5, %cst {dimension_numbers = #tpu.dot_dimension_numbers<[1], [0], [0], [1], [0, 0, 1, 1], [], []>} : vector<8x48xf32>, vector<48x128xf32>, vector<8x128xf32> -> vector<8x128xf32>
    %c0_9 = arith.constant 0 : index
    %c0_10 = arith.constant 0 : index
    %7 = vector.load %arg6[%c0_9, %c0_10] : memref<1x128xf32, #tpu.memory_space<vmem>>, vector<1x128xf32>
    %8 = vector.broadcast %7 : vector<1x128xf32> to vector<8x128xf32>
    %9 = arith.addf %6, %8 : vector<8x128xf32>
    %10 = vector.extract_strided_slice %9 {offsets = [0, 0], sizes = [8, 32], strides = [1, 1]} : vector<8x128xf32> to vector<8x32xf32>
    %cst_11 = arith.constant 5.000000e-01 : f32
    %11 = vector.broadcast %cst_11 : f32 to vector<8x32xf32>
    %12 = arith.mulf %11, %10 : vector<8x32xf32>
    %13 = math.tanh %12 : vector<8x32xf32>
    %cst_12 = arith.constant 5.000000e-01 : f32
    %14 = vector.broadcast %cst_12 : f32 to vector<8x32xf32>
    %15 = arith.mulf %14, %13 : vector<8x32xf32>
    %cst_13 = arith.constant 5.000000e-01 : f32
    %16 = vector.broadcast %cst_13 : f32 to vector<8x32xf32>
    %17 = arith.addf %15, %16 : vector<8x32xf32>
    %18 = vector.extract_strided_slice %9 {offsets = [0, 32], sizes = [8, 32], strides = [1, 1]} : vector<8x128xf32> to vector<8x32xf32>
    %cst_14 = arith.constant 5.000000e-01 : f32
    %19 = vector.broadcast %cst_14 : f32 to vector<8x32xf32>
    %20 = arith.mulf %19, %18 : vector<8x32xf32>
    %21 = math.tanh %20 : vector<8x32xf32>
    %cst_15 = arith.constant 5.000000e-01 : f32
    %22 = vector.broadcast %cst_15 : f32 to vector<8x32xf32>
    %23 = arith.mulf %22, %21 : vector<8x32xf32>
    %cst_16 = arith.constant 5.000000e-01 : f32
    %24 = vector.broadcast %cst_16 : f32 to vector<8x32xf32>
    %25 = arith.addf %23, %24 : vector<8x32xf32>
    %26 = vector.extract_strided_slice %9 {offsets = [0, 64], sizes = [8, 32], strides = [1, 1]} : vector<8x128xf32> to vector<8x32xf32>
    %27 = math.tanh %26 : vector<8x32xf32>
    %28 = vector.extract_strided_slice %9 {offsets = [0, 96], sizes = [8, 32], strides = [1, 1]} : vector<8x128xf32> to vector<8x32xf32>
    %cst_17 = arith.constant 5.000000e-01 : f32
    %29 = vector.broadcast %cst_17 : f32 to vector<8x32xf32>
    %30 = arith.mulf %29, %28 : vector<8x32xf32>
    %31 = math.tanh %30 : vector<8x32xf32>
    %cst_18 = arith.constant 5.000000e-01 : f32
    %32 = vector.broadcast %cst_18 : f32 to vector<8x32xf32>
    %33 = arith.mulf %32, %31 : vector<8x32xf32>
    %cst_19 = arith.constant 5.000000e-01 : f32
    %34 = vector.broadcast %cst_19 : f32 to vector<8x32xf32>
    %35 = arith.addf %33, %34 : vector<8x32xf32>
    %36 = arith.mulf %25, %2 : vector<8x32xf32>
    %37 = arith.mulf %17, %27 : vector<8x32xf32>
    %38 = arith.addf %36, %37 : vector<8x32xf32>
    %39 = math.tanh %38 : vector<8x32xf32>
    %40 = arith.mulf %35, %39 : vector<8x32xf32>
    %cst_20 = arith.constant 0.333333343 : f32
    %41 = vector.broadcast %cst_20 : f32 to vector<8x1xf32>
    %42 = arith.mulf %3, %41 : vector<8x1xf32>
    %cst_21 = arith.constant 5.000000e-01 : f32
    %43 = vector.broadcast %cst_21 : f32 to vector<8x1xf32>
    %44 = arith.mulf %43, %42 : vector<8x1xf32>
    %cst_22 = arith.constant 0.166666672 : f32
    %45 = vector.broadcast %cst_22 : f32 to vector<8x1xf32>
    %46 = arith.mulf %42, %45 : vector<8x1xf32>
    %c0_23 = arith.constant 0 : index
    %c0_24 = arith.constant 0 : index
    %47 = vector.load %arg12[%c0_23, %c0_24] : memref<1x32xf32, #tpu.memory_space<vmem>>, vector<1x32xf32>
    %48 = vector.broadcast %44 : vector<8x1xf32> to vector<8x32xf32>
    %49 = vector.broadcast %47 : vector<1x32xf32> to vector<8x32xf32>
    %50 = arith.mulf %48, %49 : vector<8x32xf32>
    %51 = vector.broadcast %42 : vector<8x1xf32> to vector<8x32xf32>
    %52 = vector.broadcast %47 : vector<1x32xf32> to vector<8x32xf32>
    %53 = arith.mulf %51, %52 : vector<8x32xf32>
    %c0_25 = arith.constant 0 : index
    %c0_26 = arith.constant 0 : index
    %54 = vector.load %arg7[%c0_25, %c0_26] : memref<32x32xf32, #tpu.memory_space<vmem>>, vector<32x32xf32>
    %cst_27 = arith.constant dense<0.000000e+00> : vector<8x32xf32>
    %55 = tpu.matmul %40, %54, %cst_27 {dimension_numbers = #tpu.dot_dimension_numbers<[1], [0], [0], [1], [0, 0, 1, 1], [], []>} : vector<8x32xf32>, vector<32x32xf32>, vector<8x32xf32> -> vector<8x32xf32>
    %c0_28 = arith.constant 0 : index
    %c0_29 = arith.constant 0 : index
    %56 = vector.load %arg8[%c0_28, %c0_29] : memref<1x32xf32, #tpu.memory_space<vmem>>, vector<1x32xf32>
    %57 = vector.broadcast %56 : vector<1x32xf32> to vector<8x32xf32>
    %58 = arith.addf %55, %57 : vector<8x32xf32>
    %59 = math.tanh %58 : vector<8x32xf32>
    %c0_30 = arith.constant 0 : index
    %c0_31 = arith.constant 0 : index
    %60 = vector.load %arg11[%c0_30, %c0_31] : memref<32x32xf32, #tpu.memory_space<vmem>>, vector<32x32xf32>
    %cst_32 = arith.constant dense<0.000000e+00> : vector<8x32xf32>
    %61 = tpu.matmul %59, %60, %cst_32 {dimension_numbers = #tpu.dot_dimension_numbers<[1], [0], [0], [1], [0, 0, 1, 1], [], []>} : vector<8x32xf32>, vector<32x32xf32>, vector<8x32xf32> -> vector<8x32xf32>
    %62 = arith.addf %58, %50 : vector<8x32xf32>
    %63 = vector.broadcast %44 : vector<8x1xf32> to vector<8x32xf32>
    %64 = arith.mulf %63, %61 : vector<8x32xf32>
    %65 = arith.addf %62, %64 : vector<8x32xf32>
    %66 = math.tanh %65 : vector<8x32xf32>
    %c0_33 = arith.constant 0 : index
    %c0_34 = arith.constant 0 : index
    %67 = vector.load %arg11[%c0_33, %c0_34] : memref<32x32xf32, #tpu.memory_space<vmem>>, vector<32x32xf32>
    %cst_35 = arith.constant dense<0.000000e+00> : vector<8x32xf32>
    %68 = tpu.matmul %66, %67, %cst_35 {dimension_numbers = #tpu.dot_dimension_numbers<[1], [0], [0], [1], [0, 0, 1, 1], [], []>} : vector<8x32xf32>, vector<32x32xf32>, vector<8x32xf32> -> vector<8x32xf32>
    %69 = arith.addf %58, %50 : vector<8x32xf32>
    %70 = vector.broadcast %44 : vector<8x1xf32> to vector<8x32xf32>
    %71 = arith.mulf %70, %68 : vector<8x32xf32>
    %72 = arith.addf %69, %71 : vector<8x32xf32>
    %73 = math.tanh %72 : vector<8x32xf32>
    %c0_36 = arith.constant 0 : index
    %c0_37 = arith.constant 0 : index
    %74 = vector.load %arg11[%c0_36, %c0_37] : memref<32x32xf32, #tpu.memory_space<vmem>>, vector<32x32xf32>
    %cst_38 = arith.constant dense<0.000000e+00> : vector<8x32xf32>
    %75 = tpu.matmul %73, %74, %cst_38 {dimension_numbers = #tpu.dot_dimension_numbers<[1], [0], [0], [1], [0, 0, 1, 1], [], []>} : vector<8x32xf32>, vector<32x32xf32>, vector<8x32xf32> -> vector<8x32xf32>
    %76 = arith.addf %58, %53 : vector<8x32xf32>
    %77 = vector.broadcast %42 : vector<8x1xf32> to vector<8x32xf32>
    %78 = arith.mulf %77, %75 : vector<8x32xf32>
    %79 = arith.addf %76, %78 : vector<8x32xf32>
    %80 = math.tanh %79 : vector<8x32xf32>
    %cst_39 = arith.constant 2.000000e+00 : f32
    %81 = vector.broadcast %cst_39 : f32 to vector<8x32xf32>
    %82 = arith.mulf %81, %66 : vector<8x32xf32>
    %83 = arith.addf %59, %82 : vector<8x32xf32>
    %cst_40 = arith.constant 2.000000e+00 : f32
    %84 = vector.broadcast %cst_40 : f32 to vector<8x32xf32>
    %85 = arith.mulf %84, %73 : vector<8x32xf32>
    %86 = arith.addf %83, %85 : vector<8x32xf32>
    %87 = arith.addf %86, %80 : vector<8x32xf32>
    %c0_41 = arith.constant 0 : index
    %c0_42 = arith.constant 0 : index
    %88 = vector.load %arg11[%c0_41, %c0_42] : memref<32x32xf32, #tpu.memory_space<vmem>>, vector<32x32xf32>
    %cst_43 = arith.constant dense<0.000000e+00> : vector<8x32xf32>
    %89 = tpu.matmul %80, %88, %cst_43 {dimension_numbers = #tpu.dot_dimension_numbers<[1], [0], [0], [1], [0, 0, 1, 1], [], []>} : vector<8x32xf32>, vector<32x32xf32>, vector<8x32xf32> -> vector<8x32xf32>
    %cst_44 = arith.constant 2.000000e+00 : f32
    %90 = vector.broadcast %cst_44 : f32 to vector<8x32xf32>
    %91 = arith.mulf %90, %68 : vector<8x32xf32>
    %92 = arith.addf %61, %91 : vector<8x32xf32>
    %cst_45 = arith.constant 2.000000e+00 : f32
    %93 = vector.broadcast %cst_45 : f32 to vector<8x32xf32>
    %94 = arith.mulf %93, %75 : vector<8x32xf32>
    %95 = arith.addf %92, %94 : vector<8x32xf32>
    %96 = arith.addf %95, %89 : vector<8x32xf32>
    %97 = vector.broadcast %46 : vector<8x1xf32> to vector<8x32xf32>
    %98 = arith.mulf %97, %96 : vector<8x32xf32>
    %99 = arith.addf %58, %98 : vector<8x32xf32>
    %100 = arith.addf %99, %53 : vector<8x32xf32>
    %101 = math.tanh %100 : vector<8x32xf32>
    %c0_46 = arith.constant 0 : index
    %c0_47 = arith.constant 0 : index
    %102 = vector.load %arg11[%c0_46, %c0_47] : memref<32x32xf32, #tpu.memory_space<vmem>>, vector<32x32xf32>
    %cst_48 = arith.constant dense<0.000000e+00> : vector<8x32xf32>
    %103 = tpu.matmul %101, %102, %cst_48 {dimension_numbers = #tpu.dot_dimension_numbers<[1], [0], [0], [1], [0, 0, 1, 1], [], []>} : vector<8x32xf32>, vector<32x32xf32>, vector<8x32xf32> -> vector<8x32xf32>
    %104 = arith.addf %100, %50 : vector<8x32xf32>
    %105 = vector.broadcast %44 : vector<8x1xf32> to vector<8x32xf32>
    %106 = arith.mulf %105, %103 : vector<8x32xf32>
    %107 = arith.addf %104, %106 : vector<8x32xf32>
    %108 = math.tanh %107 : vector<8x32xf32>
    %c0_49 = arith.constant 0 : index
    %c0_50 = arith.constant 0 : index
    %109 = vector.load %arg11[%c0_49, %c0_50] : memref<32x32xf32, #tpu.memory_space<vmem>>, vector<32x32xf32>
    %cst_51 = arith.constant dense<0.000000e+00> : vector<8x32xf32>
    %110 = tpu.matmul %108, %109, %cst_51 {dimension_numbers = #tpu.dot_dimension_numbers<[1], [0], [0], [1], [0, 0, 1, 1], [], []>} : vector<8x32xf32>, vector<32x32xf32>, vector<8x32xf32> -> vector<8x32xf32>
    %111 = arith.addf %100, %50 : vector<8x32xf32>
    %112 = vector.broadcast %44 : vector<8x1xf32> to vector<8x32xf32>
    %113 = arith.mulf %112, %110 : vector<8x32xf32>
    %114 = arith.addf %111, %113 : vector<8x32xf32>
    %115 = math.tanh %114 : vector<8x32xf32>
    %c0_52 = arith.constant 0 : index
    %c0_53 = arith.constant 0 : index
    %116 = vector.load %arg11[%c0_52, %c0_53] : memref<32x32xf32, #tpu.memory_space<vmem>>, vector<32x32xf32>
    %cst_54 = arith.constant dense<0.000000e+00> : vector<8x32xf32>
    %117 = tpu.matmul %115, %116, %cst_54 {dimension_numbers = #tpu.dot_dimension_numbers<[1], [0], [0], [1], [0, 0, 1, 1], [], []>} : vector<8x32xf32>, vector<32x32xf32>, vector<8x32xf32> -> vector<8x32xf32>
    %118 = arith.addf %100, %53 : vector<8x32xf32>
    %119 = vector.broadcast %42 : vector<8x1xf32> to vector<8x32xf32>
    %120 = arith.mulf %119, %117 : vector<8x32xf32>
    %121 = arith.addf %118, %120 : vector<8x32xf32>
    %122 = math.tanh %121 : vector<8x32xf32>
    %cst_55 = arith.constant 2.000000e+00 : f32
    %123 = vector.broadcast %cst_55 : f32 to vector<8x32xf32>
    %124 = arith.mulf %123, %108 : vector<8x32xf32>
    %125 = arith.addf %101, %124 : vector<8x32xf32>
    %cst_56 = arith.constant 2.000000e+00 : f32
    %126 = vector.broadcast %cst_56 : f32 to vector<8x32xf32>
    %127 = arith.mulf %126, %115 : vector<8x32xf32>
    %128 = arith.addf %125, %127 : vector<8x32xf32>
    %129 = arith.addf %128, %122 : vector<8x32xf32>
    %130 = arith.addf %87, %129 : vector<8x32xf32>
    %c0_57 = arith.constant 0 : index
    %c0_58 = arith.constant 0 : index
    %131 = vector.load %arg11[%c0_57, %c0_58] : memref<32x32xf32, #tpu.memory_space<vmem>>, vector<32x32xf32>
    %cst_59 = arith.constant dense<0.000000e+00> : vector<8x32xf32>
    %132 = tpu.matmul %122, %131, %cst_59 {dimension_numbers = #tpu.dot_dimension_numbers<[1], [0], [0], [1], [0, 0, 1, 1], [], []>} : vector<8x32xf32>, vector<32x32xf32>, vector<8x32xf32> -> vector<8x32xf32>
    %cst_60 = arith.constant 2.000000e+00 : f32
    %133 = vector.broadcast %cst_60 : f32 to vector<8x32xf32>
    %134 = arith.mulf %133, %110 : vector<8x32xf32>
    %135 = arith.addf %103, %134 : vector<8x32xf32>
    %cst_61 = arith.constant 2.000000e+00 : f32
    %136 = vector.broadcast %cst_61 : f32 to vector<8x32xf32>
    %137 = arith.mulf %136, %117 : vector<8x32xf32>
    %138 = arith.addf %135, %137 : vector<8x32xf32>
    %139 = arith.addf %138, %132 : vector<8x32xf32>
    %140 = vector.broadcast %46 : vector<8x1xf32> to vector<8x32xf32>
    %141 = arith.mulf %140, %139 : vector<8x32xf32>
    %142 = arith.addf %100, %141 : vector<8x32xf32>
    %143 = arith.addf %142, %53 : vector<8x32xf32>
    %144 = math.tanh %143 : vector<8x32xf32>
    %c0_62 = arith.constant 0 : index
    %c0_63 = arith.constant 0 : index
    %145 = vector.load %arg11[%c0_62, %c0_63] : memref<32x32xf32, #tpu.memory_space<vmem>>, vector<32x32xf32>
    %cst_64 = arith.constant dense<0.000000e+00> : vector<8x32xf32>
    %146 = tpu.matmul %144, %145, %cst_64 {dimension_numbers = #tpu.dot_dimension_numbers<[1], [0], [0], [1], [0, 0, 1, 1], [], []>} : vector<8x32xf32>, vector<32x32xf32>, vector<8x32xf32> -> vector<8x32xf32>
    %147 = arith.addf %143, %50 : vector<8x32xf32>
    %148 = vector.broadcast %44 : vector<8x1xf32> to vector<8x32xf32>
    %149 = arith.mulf %148, %146 : vector<8x32xf32>
    %150 = arith.addf %147, %149 : vector<8x32xf32>
    %151 = math.tanh %150 : vector<8x32xf32>
    %c0_65 = arith.constant 0 : index
    %c0_66 = arith.constant 0 : index
    %152 = vector.load %arg11[%c0_65, %c0_66] : memref<32x32xf32, #tpu.memory_space<vmem>>, vector<32x32xf32>
    %cst_67 = arith.constant dense<0.000000e+00> : vector<8x32xf32>
    %153 = tpu.matmul %151, %152, %cst_67 {dimension_numbers = #tpu.dot_dimension_numbers<[1], [0], [0], [1], [0, 0, 1, 1], [], []>} : vector<8x32xf32>, vector<32x32xf32>, vector<8x32xf32> -> vector<8x32xf32>
    %154 = arith.addf %143, %50 : vector<8x32xf32>
    %155 = vector.broadcast %44 : vector<8x1xf32> to vector<8x32xf32>
    %156 = arith.mulf %155, %153 : vector<8x32xf32>
    %157 = arith.addf %154, %156 : vector<8x32xf32>
    %158 = math.tanh %157 : vector<8x32xf32>
    %c0_68 = arith.constant 0 : index
    %c0_69 = arith.constant 0 : index
    %159 = vector.load %arg11[%c0_68, %c0_69] : memref<32x32xf32, #tpu.memory_space<vmem>>, vector<32x32xf32>
    %cst_70 = arith.constant dense<0.000000e+00> : vector<8x32xf32>
    %160 = tpu.matmul %158, %159, %cst_70 {dimension_numbers = #tpu.dot_dimension_numbers<[1], [0], [0], [1], [0, 0, 1, 1], [], []>} : vector<8x32xf32>, vector<32x32xf32>, vector<8x32xf32> -> vector<8x32xf32>
    %161 = arith.addf %143, %53 : vector<8x32xf32>
    %162 = vector.broadcast %42 : vector<8x1xf32> to vector<8x32xf32>
    %163 = arith.mulf %162, %160 : vector<8x32xf32>
    %164 = arith.addf %161, %163 : vector<8x32xf32>
    %165 = math.tanh %164 : vector<8x32xf32>
    %cst_71 = arith.constant 2.000000e+00 : f32
    %166 = vector.broadcast %cst_71 : f32 to vector<8x32xf32>
    %167 = arith.mulf %166, %151 : vector<8x32xf32>
    %168 = arith.addf %144, %167 : vector<8x32xf32>
    %cst_72 = arith.constant 2.000000e+00 : f32
    %169 = vector.broadcast %cst_72 : f32 to vector<8x32xf32>
    %170 = arith.mulf %169, %158 : vector<8x32xf32>
    %171 = arith.addf %168, %170 : vector<8x32xf32>
    %172 = arith.addf %171, %165 : vector<8x32xf32>
    %173 = arith.addf %130, %172 : vector<8x32xf32>
    %c0_73 = arith.constant 0 : index
    %c0_74 = arith.constant 0 : index
    %174 = vector.load %arg9[%c0_73, %c0_74] : memref<32x32xf32, #tpu.memory_space<vmem>>, vector<32x32xf32>
    %cst_75 = arith.constant dense<0.000000e+00> : vector<8x32xf32>
    %175 = tpu.matmul %173, %174, %cst_75 {dimension_numbers = #tpu.dot_dimension_numbers<[1], [0], [0], [1], [0, 0, 1, 1], [], []>} : vector<8x32xf32>, vector<32x32xf32>, vector<8x32xf32> -> vector<8x32xf32>
    %176 = vector.broadcast %46 : vector<8x1xf32> to vector<8x32xf32>
    %177 = arith.mulf %176, %175 : vector<8x32xf32>
    %178 = arith.addf %40, %177 : vector<8x32xf32>
    %cst_76 = arith.constant 3.000000e+00 : f32
    %179 = vector.broadcast %cst_76 : f32 to vector<8x1xf32>
    %180 = arith.mulf %179, %42 : vector<8x1xf32>
    %c0_77 = arith.constant 0 : index
    %c0_78 = arith.constant 0 : index
    %181 = vector.load %arg10[%c0_77, %c0_78] : memref<1x32xf32, #tpu.memory_space<vmem>>, vector<1x32xf32>
    %182 = vector.broadcast %180 : vector<8x1xf32> to vector<8x32xf32>
    %183 = vector.broadcast %181 : vector<1x32xf32> to vector<8x32xf32>
    %184 = arith.mulf %182, %183 : vector<8x32xf32>
    %185 = arith.addf %178, %184 : vector<8x32xf32>
    %c0_79 = arith.constant 0 : index
    %c0_80 = arith.constant 0 : index
    %186 = vector.load %arg13[%c0_79, %c0_80] : memref<8x32xf32, #tpu.memory_space<vmem>>, vector<8x32xf32>
    tpu.vector_store %arg13[%c0_79, %c0_80], %185 {strides = array<i32>} : memref<8x32xf32, #tpu.memory_space<vmem>>, vector<8x32xf32>,
    %c0_81 = arith.constant 0 : index
    %c0_82 = arith.constant 0 : index
    %187 = vector.load %arg14[%c0_81, %c0_82] : memref<8x32xf32, #tpu.memory_space<vmem>>, vector<8x32xf32>
    tpu.vector_store %arg14[%c0_81, %c0_82], %38 {strides = array<i32>} : memref<8x32xf32, #tpu.memory_space<vmem>>, vector<8x32xf32>,
    return
  }
  func.func @transform_0(%arg0: i32) -> (i32, i32) {
    %c0_i32 = arith.constant 0 : i32
    %c0_i32_0 = arith.constant 0 : i32
    return %arg0, %c0_i32 : i32, i32
  }
  func.func @transform_1(%arg0: i32) -> (i32, i32) {
    %c0_i32 = arith.constant 0 : i32
    %c0_i32_0 = arith.constant 0 : i32
    return %arg0, %c0_i32 : i32, i32
  }
  func.func @transform_2(%arg0: i32) -> (i32, i32) {
    %c0_i32 = arith.constant 0 : i32
    %c0_i32_0 = arith.constant 0 : i32
    return %arg0, %c0_i32 : i32, i32
  }
  func.func @transform_3(%arg0: i32) -> (i32, i32) {
    %c0_i32 = arith.constant 0 : i32
    %c0_i32_0 = arith.constant 0 : i32
    return %arg0, %c0_i32 : i32, i32
  }
  func.func @transform_4(%arg0: i32) -> (i32, i32) {
    %c0_i32 = arith.constant 0 : i32
    %c0_i32_0 = arith.constant 0 : i32
    %c0_i32_1 = arith.constant 0 : i32
    return %c0_i32, %c0_i32_0 : i32, i32
  }
  func.func @transform_5(%arg0: i32) -> (i32, i32) {
    %c0_i32 = arith.constant 0 : i32
    %c0_i32_0 = arith.constant 0 : i32
    %c0_i32_1 = arith.constant 0 : i32
    return %c0_i32, %c0_i32_0 : i32, i32
  }
  func.func @transform_6(%arg0: i32) -> (i32, i32) {
    %c0_i32 = arith.constant 0 : i32
    %c0_i32_0 = arith.constant 0 : i32
    %c0_i32_1 = arith.constant 0 : i32
    return %c0_i32, %c0_i32_0 : i32, i32
  }
  func.func @transform_7(%arg0: i32) -> (i32, i32) {
    %c0_i32 = arith.constant 0 : i32
    %c0_i32_0 = arith.constant 0 : i32
    %c0_i32_1 = arith.constant 0 : i32
    return %c0_i32, %c0_i32_0 : i32, i32
  }
  func.func @transform_8(%arg0: i32) -> (i32, i32) {
    %c0_i32 = arith.constant 0 : i32
    %c0_i32_0 = arith.constant 0 : i32
    %c0_i32_1 = arith.constant 0 : i32
    return %c0_i32, %c0_i32_0 : i32, i32
  }
  func.func @transform_9(%arg0: i32) -> (i32, i32) {
    %c0_i32 = arith.constant 0 : i32
    %c0_i32_0 = arith.constant 0 : i32
    %c0_i32_1 = arith.constant 0 : i32
    return %c0_i32, %c0_i32_0 : i32, i32
  }
  func.func @transform_10(%arg0: i32) -> (i32, i32) {
    %c0_i32 = arith.constant 0 : i32
    %c0_i32_0 = arith.constant 0 : i32
    %c0_i32_1 = arith.constant 0 : i32
    return %c0_i32, %c0_i32_0 : i32, i32
  }
  func.func @transform_11(%arg0: i32) -> (i32, i32) {
    %c0_i32 = arith.constant 0 : i32
    %c0_i32_0 = arith.constant 0 : i32
    %c0_i32_1 = arith.constant 0 : i32
    return %c0_i32, %c0_i32_0 : i32, i32
  }
  func.func @transform_12(%arg0: i32) -> (i32, i32) {
    %c0_i32 = arith.constant 0 : i32
    %c0_i32_0 = arith.constant 0 : i32
    return %arg0, %c0_i32 : i32, i32
  }
  func.func @transform_13(%arg0: i32) -> (i32, i32) {
    %c0_i32 = arith.constant 0 : i32
    %c0_i32_0 = arith.constant 0 : i32
    return %arg0, %c0_i32 : i32, i32
  }
}

</mosaic_0001>

<llo_original>
// kernel: tpu_custom_call.1
$region0: #{tpu_custom_call.1}
  #allocation0 [shape = 'u32[]', space=smem, size = 0x4, offset = 0x4, fixed_abs, tag = 'smem constant byte address 0x4 - core index']
  #allocation1 [shape = 'u32[144,128]{1,0:T(1,128)}', space=vmem, size = 0x12000, scoped, tag = 'internal scratch']
  %s0 = inlined_call_operand.hbm [shape: f32[8,16], index: 0, kind: input, shape index: {}]
  %s1 = inlined_call_operand.hbm [shape: f32[8,32], index: 1, kind: input, shape index: {}]
  %s2 = inlined_call_operand.hbm [shape: f32[8,32], index: 2, kind: input, shape index: {}]
  %s3 = inlined_call_operand.vmem [shape: f32[8,1], index: 3, kind: input, shape index: {}]
  %s4 = inlined_call_operand.hbm [shape: f32[48,128], index: 4, kind: input, shape index: {}]
  %s5 = inlined_call_operand.vmem [shape: f32[1,128], index: 5, kind: input, shape index: {}]
  %s6 = inlined_call_operand.hbm [shape: f32[32,32], index: 6, kind: input, shape index: {}]
  %s7 = inlined_call_operand.vmem [shape: f32[1,32], index: 7, kind: input, shape index: {}]
  %s8 = inlined_call_operand.vmem [shape: f32[32,32], index: 8, kind: input, shape index: {}]
  %s9 = inlined_call_operand.vmem [shape: f32[1,32], index: 9, kind: input, shape index: {}]
  %s10 = inlined_call_operand.hbm [shape: f32[32,32], index: 10, kind: input, shape index: {}]
  %s11 = inlined_call_operand.vmem [shape: f32[1,32], index: 11, kind: input, shape index: {}]
  %s12 = inlined_call_operand.hbm [shape: f32[8,32], index: 12, kind: output, shape index: {0}]
  %s13 = inlined_call_operand.hbm [shape: f32[8,32], index: 13, kind: output, shape index: {1}]
  %14 = xla_tuple %s12, %s13
  %s15 = sld [smem:[#allocation0]]
  $region90: #{tpu_custom_call.1} parent=0
    _
  %s17 = ssub.s32 1, %s15
  %s18 = scalar_select 0, %s17, %s15
  $region1: #{tpu_custom_call.1} parent=0
    #allocation2 [shape = 'u8[4096]{0}', space=vmem, size = 0x1000, scoped, tag = 'input window, operand 0, single buffered']
    #allocation3 [shape = 's32[1]{0}', space=sflag, size = 0x4, scoped, tag = 'scoped memory for tpu_custom_call.1']
    #allocation4 [shape = 's32[1]{0}', space=sflag, size = 0x4, scoped, tag = 'scoped memory for tpu_custom_call.1']
    #allocation5 [shape = 'u8[4096]{0}', space=vmem, size = 0x1000, scoped, tag = 'input window, operand 1, single buffered']
    #allocation6 [shape = 's32[1]{0}', space=sflag, size = 0x4, scoped, tag = 'scoped memory for tpu_custom_call.1']
    #allocation7 [shape = 'u8[4096]{0}', space=vmem, size = 0x1000, scoped, tag = 'input window, operand 2, single buffered']
    #allocation8 [shape = 'u8[24576]{0}', space=vmem, size = 0x6000, scoped, tag = 'input window, operand 4, single buffered']
    #allocation9 [shape = 's32[1]{0}', space=sflag, size = 0x4, scoped, tag = 'scoped memory for tpu_custom_call.1']
    #allocation10 [shape = 'u8[16384]{0}', space=vmem, size = 0x4000, scoped, tag = 'input window, operand 6, single buffered']
    #allocation11 [shape = 'u8[16384]{0}', space=vmem, size = 0x4000, scoped, tag = 'input window, operand 10, single buffered']
    #allocation12 [shape = 's32[1]{0}', space=sflag, size = 0x4, scoped, tag = 'scoped memory for tpu_custom_call.1']
    #allocation13 [shape = 'u8[4096]{0}', space=vmem, size = 0x1000, scoped, tag = 'output window, operand 0, single buffered']
    #allocation14 [shape = 'u8[4096]{0}', space=vmem, size = 0x1000, scoped, tag = 'output window, operand 1, single buffered']
    #allocation15 [shape = 's32[1]{0}', space=sflag, size = 0x4, scoped, tag = 'scoped memory for tpu_custom_call.1']
    %19 = vsyncpa [#allocation3], 0
    %20 = vsyncpa [#allocation6], 0
    %21 = vsyncpa [#allocation9], 0
    %22 = vsyncpa [#allocation12], 0
    %23 = vsyncpa [#allocation4], 0
    %24 = vsyncpa [#allocation15], 0
    // Predicated region
    $region2: #{tpu_custom_call.1} parent=1 // pred_check
      _
    $region3: #{tpu_custom_call.1} parent=1 // pred_check_branch
      %26 = sbr.rel (0) target = $region5
    $region4: #{tpu_custom_call.1} parent=1 // pred_region
      %s28 = ssub.s32 128, 128
      %29 = vsyncadd [#allocation3], %s28
      %s31 = sshll.u32 [#allocation2], 4
      %s32 = int_to_ptr.vmem [resolvable:$true] %s31
      %34 = dma.hbm_to_vmem [thread:$0]  %s0, 128, %s32, [#allocation3]
    $region5: #{tpu_custom_call.1} parent=1 // pred_fallthru
      _
    // Predicated region
    $region6: #{tpu_custom_call.1} parent=1 // pred_check
      _
    $region7: #{tpu_custom_call.1} parent=1 // pred_check_branch
      %36 = sbr.rel (0) target = $region9
    $region8: #{tpu_custom_call.1} parent=1 // pred_region
      %s38 = ssub.s32 128, 128
      %39 = vsyncadd [#allocation6], %s38
      %s41 = sshll.u32 [#allocation5], 4
      %s42 = int_to_ptr.vmem [resolvable:$true] %s41
      %44 = dma.hbm_to_vmem [thread:$0]  %s1, 128, %s42, [#allocation6]
    $region9: #{tpu_custom_call.1} parent=1 // pred_fallthru
      _
    // Predicated region
    $region10: #{tpu_custom_call.1} parent=1 // pred_check
      _
    $region11: #{tpu_custom_call.1} parent=1 // pred_check_branch
      %46 = sbr.rel (0) target = $region13
    $region12: #{tpu_custom_call.1} parent=1 // pred_region
      %s48 = ssub.s32 128, 128
      %49 = vsyncadd [#allocation6], %s48
      %s51 = sshll.u32 [#allocation7], 4
      %s52 = int_to_ptr.vmem [resolvable:$true] %s51
      %54 = dma.hbm_to_vmem [thread:$0]  %s2, 128, %s52, [#allocation6]
    $region13: #{tpu_custom_call.1} parent=1 // pred_fallthru
      _
    // Predicated region
    $region14: #{tpu_custom_call.1} parent=1 // pred_check
      _
    $region15: #{tpu_custom_call.1} parent=1 // pred_check_branch
      %56 = sbr.rel (0) target = $region17
    $region16: #{tpu_custom_call.1} parent=1 // pred_region
      _
    $region17: #{tpu_custom_call.1} parent=1 // pred_fallthru
      _
    // Predicated region
    $region18: #{tpu_custom_call.1} parent=1 // pred_check
      _
    $region19: #{tpu_custom_call.1} parent=1 // pred_check_branch
      %58 = sbr.rel (0) target = $region21
    $region20: #{tpu_custom_call.1} parent=1 // pred_region
      %s60 = ssub.s32 768, 768
      %61 = vsyncadd [#allocation9], %s60
      %s62 = sshll.u32 [#allocation8], 4
      %s63 = int_to_ptr.vmem [resolvable:$true] %s62
      %68 = dma.hbm_to_vmem [thread:$0]  %s4, 768, %s63, [#allocation9], 128, 128, 8
    $region21: #{tpu_custom_call.1} parent=1 // pred_fallthru
      _
    // Predicated region
    $region22: #{tpu_custom_call.1} parent=1 // pred_check
      _
    $region23: #{tpu_custom_call.1} parent=1 // pred_check_branch
      %70 = sbr.rel (0) target = $region25
    $region24: #{tpu_custom_call.1} parent=1 // pred_region
      _
    $region25: #{tpu_custom_call.1} parent=1 // pred_fallthru
      _
    // Predicated region
    $region26: #{tpu_custom_call.1} parent=1 // pred_check
      _
    $region27: #{tpu_custom_call.1} parent=1 // pred_check_branch
      %72 = sbr.rel (0) target = $region29
    $region28: #{tpu_custom_call.1} parent=1 // pred_region
      %s74 = ssub.s32 512, 512
      %75 = vsyncadd [#allocation9], %s74
      %s76 = sshll.u32 [#allocation10], 4
      %s77 = int_to_ptr.vmem [resolvable:$true] %s76
      %82 = dma.hbm_to_vmem [thread:$0]  %s6, 512, %s77, [#allocation9], 128, 128, 8
    $region29: #{tpu_custom_call.1} parent=1 // pred_fallthru
      _
    // Predicated region
    $region30: #{tpu_custom_call.1} parent=1 // pred_check
      _
    $region31: #{tpu_custom_call.1} parent=1 // pred_check_branch
      %84 = sbr.rel (0) target = $region33
    $region32: #{tpu_custom_call.1} parent=1 // pred_region
      _
    $region33: #{tpu_custom_call.1} parent=1 // pred_fallthru
      _
    // Predicated region
    $region34: #{tpu_custom_call.1} parent=1 // pred_check
      _
    $region35: #{tpu_custom_call.1} parent=1 // pred_check_branch
      %86 = sbr.rel (0) target = $region37
    $region36: #{tpu_custom_call.1} parent=1 // pred_region
      _
    $region37: #{tpu_custom_call.1} parent=1 // pred_fallthru
      _
    // Predicated region
    $region38: #{tpu_custom_call.1} parent=1 // pred_check
      _
    $region39: #{tpu_custom_call.1} parent=1 // pred_check_branch
      %88 = sbr.rel (0) target = $region41
    $region40: #{tpu_custom_call.1} parent=1 // pred_region
      _
    $region41: #{tpu_custom_call.1} parent=1 // pred_fallthru
      _
    // Predicated region
    $region42: #{tpu_custom_call.1} parent=1 // pred_check
      _
    $region43: #{tpu_custom_call.1} parent=1 // pred_check_branch
      %90 = sbr.rel (0) target = $region45
    $region44: #{tpu_custom_call.1} parent=1 // pred_region
      %s92 = ssub.s32 512, 512
      %93 = vsyncadd [#allocation12], %s92
      %s94 = sshll.u32 [#allocation11], 4
      %s95 = int_to_ptr.vmem [resolvable:$true] %s94
      %100 = dma.hbm_to_vmem [thread:$0]  %s10, 512, %s95, [#allocation12], 128, 128, 8
    $region45: #{tpu_custom_call.1} parent=1 // pred_fallthru
      _
    // Predicated region
    $region46: #{tpu_custom_call.1} parent=1 // pred_check
      _
    $region47: #{tpu_custom_call.1} parent=1 // pred_check_branch
      %102 = sbr.rel (0) target = $region49
    $region48: #{tpu_custom_call.1} parent=1 // pred_region
      _
    $region49: #{tpu_custom_call.1} parent=1 // pred_fallthru
      _
    // Predicated region
    $region50: #{tpu_custom_call.1} parent=1 // pred_check
      _
    $region51: #{tpu_custom_call.1} parent=1 // pred_check_branch
      %104 = sbr.rel (0) target = $region53
    $region52: #{tpu_custom_call.1} parent=1 // pred_region
      %105 = dma.done [#allocation3], 128
    $region53: #{tpu_custom_call.1} parent=1 // pred_fallthru
      _
    // Predicated region
    $region54: #{tpu_custom_call.1} parent=1 // pred_check
      _
    $region55: #{tpu_custom_call.1} parent=1 // pred_check_branch
      %107 = sbr.rel (0) target = $region57
    $region56: #{tpu_custom_call.1} parent=1 // pred_region
      %108 = dma.done [#allocation6], 128
    $region57: #{tpu_custom_call.1} parent=1 // pred_fallthru
      _
    // Predicated region
    $region58: #{tpu_custom_call.1} parent=1 // pred_check
      _
    $region59: #{tpu_custom_call.1} parent=1 // pred_check_branch
      %110 = sbr.rel (0) target = $region61
    $region60: #{tpu_custom_call.1} parent=1 // pred_region
      %111 = dma.done [#allocation6], 128
    $region61: #{tpu_custom_call.1} parent=1 // pred_fallthru
      _
    // Predicated region
    $region62: #{tpu_custom_call.1} parent=1 // pred_check
      _
    $region63: #{tpu_custom_call.1} parent=1 // pred_check_branch
      %113 = sbr.rel (0) target = $region65
    $region64: #{tpu_custom_call.1} parent=1 // pred_region
      %114 = dma.done [#allocation9], 768
    $region65: #{tpu_custom_call.1} parent=1 // pred_fallthru
      _
    // Predicated region
    $region66: #{tpu_custom_call.1} parent=1 // pred_check
      _
    $region67: #{tpu_custom_call.1} parent=1 // pred_check_branch
      %116 = sbr.rel (0) target = $region69
    $region68: #{tpu_custom_call.1} parent=1 // pred_region
      %117 = dma.done [#allocation9], 512
    $region69: #{tpu_custom_call.1} parent=1 // pred_fallthru
      _
    // Predicated region
    $region70: #{tpu_custom_call.1} parent=1 // pred_check
      _
    $region71: #{tpu_custom_call.1} parent=1 // pred_check_branch
      %119 = sbr.rel (0) target = $region73
    $region72: #{tpu_custom_call.1} parent=1 // pred_region
      %120 = dma.done [#allocation12], 512
    $region73: #{tpu_custom_call.1} parent=1 // pred_fallthru
      _
    %v121 = vld [vmem:[#allocation2] sm:$0xff]
    %v122 = vld [vmem:[#allocation5] sm:$0xff]
    %v123 = vld [vmem:[#allocation7] sm:$0xff]
    %v124 = vld [vmem:[%s3] sm:$0xff]
    %126 = vrot.lane.b32.xlu0 %v122, 16
    %v127 = vpop.permute.xlu0 %126
    %vm129 = vcmask 130048
    %v130 = vsel %vm129, %v121, %v127
    %v131 = vld [vmem:[#allocation8] sm:$0xff]
    %v132 = vld [vmem:[#allocation8 + $0x8] sm:$0xff]
    %v133 = vld [vmem:[#allocation8 + $0x10] sm:$0xff]
    %v134 = vld [vmem:[#allocation8 + $0x18] sm:$0xff]
    %v135 = vld [vmem:[#allocation8 + $0x20] sm:$0xff]
    %v136 = vld [vmem:[#allocation8 + $0x28] sm:$0xff]
    %v137 = vld [vmem:[%s5] sm:$0x1]
    %v139 = vlaneseq
    %v140 = vshrl.u32 %v139, 7
    %v141 = vsub.s32 0, %v140
    %v142 = vrot.slane %v137, %v141
    %vm144 = vcmask 392192
    %v146 = vsel %vm144, %v130, 0
    %148 = vmatprep.subr.mxu0 0.0
    %149 = vmatpush1.msra.mxu0 %v131
    %150 = vmatprep.subr.mxu0 0.0
    %151 = vmatpush1.msra.mxu0 %v132
    %152 = vmatprep.subr.mxu0 0.0
    %153 = vmatpush1.msra.mxu0 %v133
    %154 = vmatprep.subr.mxu0 0.0
    %155 = vmatpush1.msra.mxu0 %v134
    %156 = vmatprep.subr.mxu0 0.0
    %157 = vmatpush1.msra.mxu0 %v135
    %158 = vmatprep.subr.mxu0 0.0
    %159 = vmatpush1.msra.mxu0 %v136
    %160 = vmatprep.subr.mxu0 0.0
    %161 = vmatpush1.msra.mxu0 0.0
    %162 = vmatprep.subr.mxu0 0.0
    %163 = vmatpush1.msra.mxu0 0.0
    %164 = vmatprep.subr.mxu0 0.0
    %165 = vmatpush1.msra.mxu0 0.0
    %166 = vmatprep.subr.mxu0 0.0
    %167 = vmatpush1.msra.mxu0 0.0
    %168 = vmatprep.subr.mxu0 0.0
    %169 = vmatpush1.msra.mxu0 0.0
    %170 = vmatprep.subr.mxu0 0.0
    %171 = vmatpush1.msra.mxu0 0.0
    %172 = vmatprep.subr.mxu0 0.0
    %173 = vmatpush1.msra.mxu0 0.0
    %174 = vmatprep.subr.mxu0 0.0
    %175 = vmatpush1.msra.mxu0 0.0
    %176 = vmatprep.subr.mxu0 0.0
    %177 = vmatpush1.msra.mxu0 0.0
    %178 = vmatprep.subr.mxu0 0.0
    %179 = vmatpush1.msra.mxu0 0.0
    %180 = vmatprep.subr.mxu0 0.0
    %181 = vmatpush1.msra.mxu0 0.0
    %182 = vmatprep.subr.mxu0 0.0
    %183 = vmatpush1.msra.mxu0 0.0
    %184 = vmatprep.subr.mxu0 0.0
    %185 = vmatpush1.msra.mxu0 0.0
    %186 = vmatprep.subr.mxu0 0.0
    %187 = vmatpush1.msra.mxu0 0.0
    %188 = vmatprep.subr.mxu0 0.0
    %189 = vmatpush1.msra.mxu0 0.0
    %190 = vmatprep.subr.mxu0 0.0
    %191 = vmatpush1.msra.mxu0 0.0
    %192 = vmatprep.subr.mxu0 0.0
    %193 = vmatpush1.msra.mxu0 0.0
    %194 = vmatprep.subr.mxu0 0.0
    %195 = vmatpush1.msra.mxu0 0.0
    %196 = vmatprep.subr.mxu0 0.0
    %197 = vmatpush1.msra.mxu0 0.0
    %198 = vmatprep.subr.mxu0 0.0
    %199 = vmatpush1.msra.mxu0 0.0
    %200 = vmatprep.subr.mxu0 0.0
    %201 = vmatpush1.msra.mxu0 0.0
    %202 = vmatprep.subr.mxu0 0.0
    %203 = vmatpush1.msra.mxu0 0.0
    %204 = vmatprep.subr.mxu0 0.0
    %205 = vmatpush1.msra.mxu0 0.0
    %206 = vmatprep.subr.mxu0 0.0
    %207 = vmatpush1.msra.mxu0 0.0
    %208 = vmatprep.subr.mxu0 0.0
    %209 = vmatpush1.msra.mxu0 0.0
    %210 = vmatprep.subr.mxu0 0.0
    %211 = vmatpush1.msra.mxu0 0.0
    %212 = vmatprep.mubr.f32.mxu0 0.0
    %213 = vmatmul.mubr.f32.gmra.mrb[0].mxu0 %v146
    %v214 = vpop.f32.mrb[0].mxu0
    %v215 = vadd.f32 %v142, %v214
    %v216 = vpop.f32.mrb[0].mxu0
    %217 = vdwg.mxu0
    %v218 = vmul.f32 %v215, 0.5
    %v219 = vtanh.pop %v218
    %v220 = vmul.f32 %v219, 0.5
    %v221 = vadd.f32 %v220, 0.5
    %v222 = vtanh.pop %v215
    %224 = vrot.lane.b32.xlu0 %v123, 32
    %v225 = vpop.permute.xlu0 %224
    %v227 = vmul.f32 %v221, %v225
    %229 = vrot.lane.b32.xlu0 %v222, 64
    %v230 = vpop.permute.xlu0 %229
    %v232 = vmul.f32 %v221, %v230
    %234 = vrot.lane.b32.xlu0 %v232, 32
    %v235 = vpop.permute.xlu0 %234
    %v237 = vadd.f32 %v227, %v235
    %v238 = vtanh.pop %v237
    %240 = vrot.lane.b32.xlu0 %v238, 64
    %v241 = vpop.permute.xlu0 %240
    %v243 = vmul.f32 %v221, %v241
    %v244 = vmul.f32 %v124, 0.33333334
    %v245 = vmul.f32 %v244, 0.5
    %v246 = vmul.f32 %v244, 0.16666667
    %v247 = vld [vmem:[%s11] sm:$0x1]
    %249 = vset.pattern.permute.xlu0 0
    %250 = vperm.xlu0 %249, %v245
    %v251 = vpop.permute.xlu0 %250
    %v254 = vlaneseq
    %v255 = vshrl.u32 %v254, 7
    %v256 = vsub.s32 0, %v255
    %v257 = vrot.slane %v247, %v256
    %v259 = vmul.f32 %v251, %v257
    %261 = vset.pattern.permute.xlu0 0
    %262 = vperm.xlu0 %261, %v244
    %v263 = vpop.permute.xlu0 %262
    %v265 = vmul.f32 %v263, %v257
    %v266 = vld [vmem:[#allocation10] sm:$0xff]
    %v267 = vld [vmem:[#allocation10 + $0x8] sm:$0xff]
    %v268 = vld [vmem:[#allocation10 + $0x10] sm:$0xff]
    %v269 = vld [vmem:[#allocation10 + $0x18] sm:$0xff]
    %v270 = vld [vmem:[%s7] sm:$0x1]
    %v272 = vlaneseq
    %v273 = vshrl.u32 %v272, 7
    %v274 = vsub.s32 0, %v273
    %v275 = vrot.slane %v270, %v274
    %278 = vrot.lane.b32.xlu0 %v243, 32
    %v279 = vpop.permute.xlu0 %278
    %vm280 = vcmask 261120
    %v281 = vsel %vm280, %v279, 0
    %283 = vmatprep.subr.mxu0 0.0
    %284 = vmatpush1.msra.mxu0 %v266
    %285 = vmatprep.subr.mxu0 0.0
    %286 = vmatpush1.msra.mxu0 %v267
    %287 = vmatprep.subr.mxu0 0.0
    %288 = vmatpush1.msra.mxu0 %v268
    %289 = vmatprep.subr.mxu0 0.0
    %290 = vmatpush1.msra.mxu0 %v269
    %291 = vmatprep.subr.mxu0 0.0
    %292 = vmatpush1.msra.mxu0 0.0
    %293 = vmatprep.subr.mxu0 0.0
    %294 = vmatpush1.msra.mxu0 0.0
    %295 = vmatprep.subr.mxu0 0.0
    %296 = vmatpush1.msra.mxu0 0.0
    %297 = vmatprep.subr.mxu0 0.0
    %298 = vmatpush1.msra.mxu0 0.0
    %299 = vmatprep.subr.mxu0 0.0
    %300 = vmatpush1.msra.mxu0 0.0
    %301 = vmatprep.subr.mxu0 0.0
    %302 = vmatpush1.msra.mxu0 0.0
    %303 = vmatprep.subr.mxu0 0.0
    %304 = vmatpush1.msra.mxu0 0.0
    %305 = vmatprep.subr.mxu0 0.0
    %306 = vmatpush1.msra.mxu0 0.0
    %307 = vmatprep.subr.mxu0 0.0
    %308 = vmatpush1.msra.mxu0 0.0
    %309 = vmatprep.subr.mxu0 0.0
    %310 = vmatpush1.msra.mxu0 0.0
    %311 = vmatprep.subr.mxu0 0.0
    %312 = vmatpush1.msra.mxu0 0.0
    %313 = vmatprep.subr.mxu0 0.0
    %314 = vmatpush1.msra.mxu0 0.0
    %315 = vmatprep.subr.mxu0 0.0
    %316 = vmatpush1.msra.mxu0 0.0
    %317 = vmatprep.subr.mxu0 0.0
    %318 = vmatpush1.msra.mxu0 0.0
    %319 = vmatprep.subr.mxu0 0.0
    %320 = vmatpush1.msra.mxu0 0.0
    %321 = vmatprep.subr.mxu0 0.0
    %322 = vmatpush1.msra.mxu0 0.0
    %323 = vmatprep.subr.mxu0 0.0
    %324 = vmatpush1.msra.mxu0 0.0
    %325 = vmatprep.subr.mxu0 0.0
    %326 = vmatpush1.msra.mxu0 0.0
    %327 = vmatprep.subr.mxu0 0.0
    %328 = vmatpush1.msra.mxu0 0.0
    %329 = vmatprep.subr.mxu0 0.0
    %330 = vmatpush1.msra.mxu0 0.0
    %331 = vmatprep.subr.mxu0 0.0
    %332 = vmatpush1.msra.mxu0 0.0
    %333 = vmatprep.subr.mxu0 0.0
    %334 = vmatpush1.msra.mxu0 0.0
    %335 = vmatprep.subr.mxu0 0.0
    %336 = vmatpush1.msra.mxu0 0.0
    %337 = vmatprep.subr.mxu0 0.0
    %338 = vmatpush1.msra.mxu0 0.0
    %339 = vmatprep.subr.mxu0 0.0
    %340 = vmatpush1.msra.mxu0 0.0
    %341 = vmatprep.subr.mxu0 0.0
    %342 = vmatpush1.msra.mxu0 0.0
    %343 = vmatprep.subr.mxu0 0.0
    %344 = vmatpush1.msra.mxu0 0.0
    %345 = vmatprep.subr.mxu0 0.0
    %346 = vmatpush1.msra.mxu0 0.0
    %347 = vmatprep.mubr.f32.mxu0 0.0
    %348 = vmatmul.mubr.f32.gmra.mrb[0].mxu0 %v281
    %v349 = vpop.f32.mrb[0].mxu0
    %v350 = vadd.f32 %v275, %v349
    %v351 = vpop.f32.mrb[0].mxu0
    %352 = vdwg.mxu0
    %v353 = vtanh.pop %v350
    %v354 = vld [vmem:[#allocation11] sm:$0xff]
    %v355 = vld [vmem:[#allocation11 + $0x8] sm:$0xff]
    %v356 = vld [vmem:[#allocation11 + $0x10] sm:$0xff]
    %v357 = vld [vmem:[#allocation11 + $0x18] sm:$0xff]
    %v359 = vsel %vm280, %v353, 0
    %361 = vmatprep.subr.mxu0 0.0
    %362 = vmatpush1.msra.mxu0 %v354
    %363 = vmatprep.subr.mxu0 0.0
    %364 = vmatpush1.msra.mxu0 %v355
    %365 = vmatprep.subr.mxu0 0.0
    %366 = vmatpush1.msra.mxu0 %v356
    %367 = vmatprep.subr.mxu0 0.0
    %368 = vmatpush1.msra.mxu0 %v357
    %369 = vmatprep.subr.mxu0 0.0
    %370 = vmatpush1.msra.mxu0 0.0
    %371 = vmatprep.subr.mxu0 0.0
    %372 = vmatpush1.msra.mxu0 0.0
    %373 = vmatprep.subr.mxu0 0.0
    %374 = vmatpush1.msra.mxu0 0.0
    %375 = vmatprep.subr.mxu0 0.0
    %376 = vmatpush1.msra.mxu0 0.0
    %377 = vmatprep.subr.mxu0 0.0
    %378 = vmatpush1.msra.mxu0 0.0
    %379 = vmatprep.subr.mxu0 0.0
    %380 = vmatpush1.msra.mxu0 0.0
    %381 = vmatprep.subr.mxu0 0.0
    %382 = vmatpush1.msra.mxu0 0.0
    %383 = vmatprep.subr.mxu0 0.0
    %384 = vmatpush1.msra.mxu0 0.0
    %385 = vmatprep.subr.mxu0 0.0
    %386 = vmatpush1.msra.mxu0 0.0
    %387 = vmatprep.subr.mxu0 0.0
    %388 = vmatpush1.msra.mxu0 0.0
    %389 = vmatprep.subr.mxu0 0.0
    %390 = vmatpush1.msra.mxu0 0.0
    %391 = vmatprep.subr.mxu0 0.0
    %392 = vmatpush1.msra.mxu0 0.0
    %393 = vmatprep.subr.mxu0 0.0
    %394 = vmatpush1.msra.mxu0 0.0
    %395 = vmatprep.subr.mxu0 0.0
    %396 = vmatpush1.msra.mxu0 0.0
    %397 = vmatprep.subr.mxu0 0.0
    %398 = vmatpush1.msra.mxu0 0.0
    %399 = vmatprep.subr.mxu0 0.0
    %400 = vmatpush1.msra.mxu0 0.0
    %401 = vmatprep.subr.mxu0 0.0
    %402 = vmatpush1.msra.mxu0 0.0
    %403 = vmatprep.subr.mxu0 0.0
    %404 = vmatpush1.msra.mxu0 0.0
    %405 = vmatprep.subr.mxu0 0.0
    %406 = vmatpush1.msra.mxu0 0.0
    %407 = vmatprep.subr.mxu0 0.0
    %408 = vmatpush1.msra.mxu0 0.0
    %409 = vmatprep.subr.mxu0 0.0
    %410 = vmatpush1.msra.mxu0 0.0
    %411 = vmatprep.subr.mxu0 0.0
    %412 = vmatpush1.msra.mxu0 0.0
    %413 = vmatprep.subr.mxu0 0.0
    %414 = vmatpush1.msra.mxu0 0.0
    %415 = vmatprep.subr.mxu0 0.0
    %416 = vmatpush1.msra.mxu0 0.0
    %417 = vmatprep.subr.mxu0 0.0
    %418 = vmatpush1.msra.mxu0 0.0
    %419 = vmatprep.subr.mxu0 0.0
    %420 = vmatpush1.msra.mxu0 0.0
    %421 = vmatprep.subr.mxu0 0.0
    %422 = vmatpush1.msra.mxu0 0.0
    %423 = vmatprep.subr.mxu0 0.0
    %424 = vmatpush1.msra.mxu0 0.0
    %425 = vmatprep.mubr.f32.mxu0 0.0
    %426 = vmatmul.mubr.f32.gmra.mrb[0].mxu0 %v359
    %v427 = vpop.f32.mrb[0].mxu0
    %v428 = vadd.f32 0.0, %v427
    %v429 = vpop.f32.mrb[0].mxu0
    %430 = vdwg.mxu0
    %v431 = vadd.f32 %v350, %v259
    %v432 = vmul.f32 %v251, %v428
    %v433 = vadd.f32 %v431, %v432
    %v434 = vtanh.pop %v433
    %v436 = vsel %vm280, %v434, 0
    %438 = vmatprep.subr.mxu0 0.0
    %439 = vmatpush1.msra.mxu0 %v354
    %440 = vmatprep.subr.mxu0 0.0
    %441 = vmatpush1.msra.mxu0 %v355
    %442 = vmatprep.subr.mxu0 0.0
    %443 = vmatpush1.msra.mxu0 %v356
    %444 = vmatprep.subr.mxu0 0.0
    %445 = vmatpush1.msra.mxu0 %v357
    %446 = vmatprep.subr.mxu0 0.0
    %447 = vmatpush1.msra.mxu0 0.0
    %448 = vmatprep.subr.mxu0 0.0
    %449 = vmatpush1.msra.mxu0 0.0
    %450 = vmatprep.subr.mxu0 0.0
    %451 = vmatpush1.msra.mxu0 0.0
    %452 = vmatprep.subr.mxu0 0.0
    %453 = vmatpush1.msra.mxu0 0.0
    %454 = vmatprep.subr.mxu0 0.0
    %455 = vmatpush1.msra.mxu0 0.0
    %456 = vmatprep.subr.mxu0 0.0
    %457 = vmatpush1.msra.mxu0 0.0
    %458 = vmatprep.subr.mxu0 0.0
    %459 = vmatpush1.msra.mxu0 0.0
    %460 = vmatprep.subr.mxu0 0.0
    %461 = vmatpush1.msra.mxu0 0.0
    %462 = vmatprep.subr.mxu0 0.0
    %463 = vmatpush1.msra.mxu0 0.0
    %464 = vmatprep.subr.mxu0 0.0
    %465 = vmatpush1.msra.mxu0 0.0
    %466 = vmatprep.subr.mxu0 0.0
    %467 = vmatpush1.msra.mxu0 0.0
    %468 = vmatprep.subr.mxu0 0.0
    %469 = vmatpush1.msra.mxu0 0.0
    %470 = vmatprep.subr.mxu0 0.0
    %471 = vmatpush1.msra.mxu0 0.0
    %472 = vmatprep.subr.mxu0 0.0
    %473 = vmatpush1.msra.mxu0 0.0
    %474 = vmatprep.subr.mxu0 0.0
    %475 = vmatpush1.msra.mxu0 0.0
    %476 = vmatprep.subr.mxu0 0.0
    %477 = vmatpush1.msra.mxu0 0.0
    %478 = vmatprep.subr.mxu0 0.0
    %479 = vmatpush1.msra.mxu0 0.0
    %480 = vmatprep.subr.mxu0 0.0
    %481 = vmatpush1.msra.mxu0 0.0
    %482 = vmatprep.subr.mxu0 0.0
    %483 = vmatpush1.msra.mxu0 0.0
    %484 = vmatprep.subr.mxu0 0.0
    %485 = vmatpush1.msra.mxu0 0.0
    %486 = vmatprep.subr.mxu0 0.0
    %487 = vmatpush1.msra.mxu0 0.0
    %488 = vmatprep.subr.mxu0 0.0
    %489 = vmatpush1.msra.mxu0 0.0
    %490 = vmatprep.subr.mxu0 0.0
    %491 = vmatpush1.msra.mxu0 0.0
    %492 = vmatprep.subr.mxu0 0.0
    %493 = vmatpush1.msra.mxu0 0.0
    %494 = vmatprep.subr.mxu0 0.0
    %495 = vmatpush1.msra.mxu0 0.0
    %496 = vmatprep.subr.mxu0 0.0
    %497 = vmatpush1.msra.mxu0 0.0
    %498 = vmatprep.subr.mxu0 0.0
    %499 = vmatpush1.msra.mxu0 0.0
    %500 = vmatprep.subr.mxu0 0.0
    %501 = vmatpush1.msra.mxu0 0.0
    %502 = vmatprep.mubr.f32.mxu0 0.0
    %503 = vmatmul.mubr.f32.gmra.mrb[0].mxu0 %v436
    %v504 = vpop.f32.mrb[0].mxu0
    %v505 = vadd.f32 0.0, %v504
    %v506 = vpop.f32.mrb[0].mxu0
    %507 = vdwg.mxu0
    %v508 = vmul.f32 %v251, %v505
    %v509 = vadd.f32 %v431, %v508
    %v510 = vtanh.pop %v509
    %v512 = vsel %vm280, %v510, 0
    %514 = vmatprep.subr.mxu0 0.0
    %515 = vmatpush1.msra.mxu0 %v354
    %516 = vmatprep.subr.mxu0 0.0
    %517 = vmatpush1.msra.mxu0 %v355
    %518 = vmatprep.subr.mxu0 0.0
    %519 = vmatpush1.msra.mxu0 %v356
    %520 = vmatprep.subr.mxu0 0.0
    %521 = vmatpush1.msra.mxu0 %v357
    %522 = vmatprep.subr.mxu0 0.0
    %523 = vmatpush1.msra.mxu0 0.0
    %524 = vmatprep.subr.mxu0 0.0
    %525 = vmatpush1.msra.mxu0 0.0
    %526 = vmatprep.subr.mxu0 0.0
    %527 = vmatpush1.msra.mxu0 0.0
    %528 = vmatprep.subr.mxu0 0.0
    %529 = vmatpush1.msra.mxu0 0.0
    %530 = vmatprep.subr.mxu0 0.0
    %531 = vmatpush1.msra.mxu0 0.0
    %532 = vmatprep.subr.mxu0 0.0
    %533 = vmatpush1.msra.mxu0 0.0
    %534 = vmatprep.subr.mxu0 0.0
    %535 = vmatpush1.msra.mxu0 0.0
    %536 = vmatprep.subr.mxu0 0.0
    %537 = vmatpush1.msra.mxu0 0.0
    %538 = vmatprep.subr.mxu0 0.0
    %539 = vmatpush1.msra.mxu0 0.0
    %540 = vmatprep.subr.mxu0 0.0
    %541 = vmatpush1.msra.mxu0 0.0
    %542 = vmatprep.subr.mxu0 0.0
    %543 = vmatpush1.msra.mxu0 0.0
    %544 = vmatprep.subr.mxu0 0.0
    %545 = vmatpush1.msra.mxu0 0.0
    %546 = vmatprep.subr.mxu0 0.0
    %547 = vmatpush1.msra.mxu0 0.0
    %548 = vmatprep.subr.mxu0 0.0
    %549 = vmatpush1.msra.mxu0 0.0
    %550 = vmatprep.subr.mxu0 0.0
    %551 = vmatpush1.msra.mxu0 0.0
    %552 = vmatprep.subr.mxu0 0.0
    %553 = vmatpush1.msra.mxu0 0.0
    %554 = vmatprep.subr.mxu0 0.0
    %555 = vmatpush1.msra.mxu0 0.0
    %556 = vmatprep.subr.mxu0 0.0
    %557 = vmatpush1.msra.mxu0 0.0
    %558 = vmatprep.subr.mxu0 0.0
    %559 = vmatpush1.msra.mxu0 0.0
    %560 = vmatprep.subr.mxu0 0.0
    %561 = vmatpush1.msra.mxu0 0.0
    %562 = vmatprep.subr.mxu0 0.0
    %563 = vmatpush1.msra.mxu0 0.0
    %564 = vmatprep.subr.mxu0 0.0
    %565 = vmatpush1.msra.mxu0 0.0
    %566 = vmatprep.subr.mxu0 0.0
    %567 = vmatpush1.msra.mxu0 0.0
    %568 = vmatprep.subr.mxu0 0.0
    %569 = vmatpush1.msra.mxu0 0.0
    %570 = vmatprep.subr.mxu0 0.0
    %571 = vmatpush1.msra.mxu0 0.0
    %572 = vmatprep.subr.mxu0 0.0
    %573 = vmatpush1.msra.mxu0 0.0
    %574 = vmatprep.subr.mxu0 0.0
    %575 = vmatpush1.msra.mxu0 0.0
    %576 = vmatprep.subr.mxu0 0.0
    %577 = vmatpush1.msra.mxu0 0.0
    %578 = vmatprep.mubr.f32.mxu0 0.0
    %579 = vmatmul.mubr.f32.gmra.mrb[0].mxu0 %v512
    %v580 = vpop.f32.mrb[0].mxu0
    %v581 = vadd.f32 0.0, %v580
    %v582 = vpop.f32.mrb[0].mxu0
    %583 = vdwg.mxu0
    %v584 = vadd.f32 %v350, %v265
    %v585 = vmul.f32 %v263, %v581
    %v586 = vadd.f32 %v584, %v585
    %v587 = vtanh.pop %v586
    %v588 = vmul.f32 %v434, 2.0
    %v589 = vadd.f32 %v353, %v588
    %v590 = vmul.f32 %v510, 2.0
    %v591 = vadd.f32 %v589, %v590
    %v592 = vadd.f32 %v591, %v587
    %v594 = vsel %vm280, %v587, 0
    %596 = vmatprep.subr.mxu0 0.0
    %597 = vmatpush1.msra.mxu0 %v354
    %598 = vmatprep.subr.mxu0 0.0
    %599 = vmatpush1.msra.mxu0 %v355
    %600 = vmatprep.subr.mxu0 0.0
    %601 = vmatpush1.msra.mxu0 %v356
    %602 = vmatprep.subr.mxu0 0.0
    %603 = vmatpush1.msra.mxu0 %v357
    %604 = vmatprep.subr.mxu0 0.0
    %605 = vmatpush1.msra.mxu0 0.0
    %606 = vmatprep.subr.mxu0 0.0
    %607 = vmatpush1.msra.mxu0 0.0
    %608 = vmatprep.subr.mxu0 0.0
    %609 = vmatpush1.msra.mxu0 0.0
    %610 = vmatprep.subr.mxu0 0.0
    %611 = vmatpush1.msra.mxu0 0.0
    %612 = vmatprep.subr.mxu0 0.0
    %613 = vmatpush1.msra.mxu0 0.0
    %614 = vmatprep.subr.mxu0 0.0
    %615 = vmatpush1.msra.mxu0 0.0
    %616 = vmatprep.subr.mxu0 0.0
    %617 = vmatpush1.msra.mxu0 0.0
    %618 = vmatprep.subr.mxu0 0.0
    %619 = vmatpush1.msra.mxu0 0.0
    %620 = vmatprep.subr.mxu0 0.0
    %621 = vmatpush1.msra.mxu0 0.0
    %622 = vmatprep.subr.mxu0 0.0
    %623 = vmatpush1.msra.mxu0 0.0
    %624 = vmatprep.subr.mxu0 0.0
    %625 = vmatpush1.msra.mxu0 0.0
    %626 = vmatprep.subr.mxu0 0.0
    %627 = vmatpush1.msra.mxu0 0.0
    %628 = vmatprep.subr.mxu0 0.0
    %629 = vmatpush1.msra.mxu0 0.0
    %630 = vmatprep.subr.mxu0 0.0
    %631 = vmatpush1.msra.mxu0 0.0
    %632 = vmatprep.subr.mxu0 0.0
    %633 = vmatpush1.msra.mxu0 0.0
    %634 = vmatprep.subr.mxu0 0.0
    %635 = vmatpush1.msra.mxu0 0.0
    %636 = vmatprep.subr.mxu0 0.0
    %637 = vmatpush1.msra.mxu0 0.0
    %638 = vmatprep.subr.mxu0 0.0
    %639 = vmatpush1.msra.mxu0 0.0
    %640 = vmatprep.subr.mxu0 0.0
    %641 = vmatpush1.msra.mxu0 0.0
    %642 = vmatprep.subr.mxu0 0.0
    %643 = vmatpush1.msra.mxu0 0.0
    %644 = vmatprep.subr.mxu0 0.0
    %645 = vmatpush1.msra.mxu0 0.0
    %646 = vmatprep.subr.mxu0 0.0
    %647 = vmatpush1.msra.mxu0 0.0
    %648 = vmatprep.subr.mxu0 0.0
    %649 = vmatpush1.msra.mxu0 0.0
    %650 = vmatprep.subr.mxu0 0.0
    %651 = vmatpush1.msra.mxu0 0.0
    %652 = vmatprep.subr.mxu0 0.0
    %653 = vmatpush1.msra.mxu0 0.0
    %654 = vmatprep.subr.mxu0 0.0
    %655 = vmatpush1.msra.mxu0 0.0
    %656 = vmatprep.subr.mxu0 0.0
    %657 = vmatpush1.msra.mxu0 0.0
    %658 = vmatprep.subr.mxu0 0.0
    %659 = vmatpush1.msra.mxu0 0.0
    %660 = vmatprep.mubr.f32.mxu0 0.0
    %661 = vmatmul.mubr.f32.gmra.mrb[0].mxu0 %v594
    %v662 = vpop.f32.mrb[0].mxu0
    %v663 = vadd.f32 0.0, %v662
    %v664 = vpop.f32.mrb[0].mxu0
    %665 = vdwg.mxu0
    %v666 = vmul.f32 %v505, 2.0
    %v667 = vadd.f32 %v428, %v666
    %v668 = vmul.f32 %v581, 2.0
    %v669 = vadd.f32 %v667, %v668
    %v670 = vadd.f32 %v669, %v663
    %672 = vset.pattern.permute.xlu0 0
    %673 = vperm.xlu0 %672, %v246
    %v674 = vpop.permute.xlu0 %673
    %v676 = vmul.f32 %v674, %v670
    %v677 = vadd.f32 %v350, %v676
    %v678 = vadd.f32 %v677, %v265
    %v679 = vtanh.pop %v678
    %v681 = vsel %vm280, %v679, 0
    %683 = vmatprep.subr.mxu0 0.0
    %684 = vmatpush1.msra.mxu0 %v354
    %685 = vmatprep.subr.mxu0 0.0
    %686 = vmatpush1.msra.mxu0 %v355
    %687 = vmatprep.subr.mxu0 0.0
    %688 = vmatpush1.msra.mxu0 %v356
    %689 = vmatprep.subr.mxu0 0.0
    %690 = vmatpush1.msra.mxu0 %v357
    %691 = vmatprep.subr.mxu0 0.0
    %692 = vmatpush1.msra.mxu0 0.0
    %693 = vmatprep.subr.mxu0 0.0
    %694 = vmatpush1.msra.mxu0 0.0
    %695 = vmatprep.subr.mxu0 0.0
    %696 = vmatpush1.msra.mxu0 0.0
    %697 = vmatprep.subr.mxu0 0.0
    %698 = vmatpush1.msra.mxu0 0.0
    %699 = vmatprep.subr.mxu0 0.0
    %700 = vmatpush1.msra.mxu0 0.0
    %701 = vmatprep.subr.mxu0 0.0
    %702 = vmatpush1.msra.mxu0 0.0
    %703 = vmatprep.subr.mxu0 0.0
    %704 = vmatpush1.msra.mxu0 0.0
    %705 = vmatprep.subr.mxu0 0.0
    %706 = vmatpush1.msra.mxu0 0.0
    %707 = vmatprep.subr.mxu0 0.0
    %708 = vmatpush1.msra.mxu0 0.0
    %709 = vmatprep.subr.mxu0 0.0
    %710 = vmatpush1.msra.mxu0 0.0
    %711 = vmatprep.subr.mxu0 0.0
    %712 = vmatpush1.msra.mxu0 0.0
    %713 = vmatprep.subr.mxu0 0.0
    %714 = vmatpush1.msra.mxu0 0.0
    %715 = vmatprep.subr.mxu0 0.0
    %716 = vmatpush1.msra.mxu0 0.0
    %717 = vmatprep.subr.mxu0 0.0
    %718 = vmatpush1.msra.mxu0 0.0
    %719 = vmatprep.subr.mxu0 0.0
    %720 = vmatpush1.msra.mxu0 0.0
    %721 = vmatprep.subr.mxu0 0.0
    %722 = vmatpush1.msra.mxu0 0.0
    %723 = vmatprep.subr.mxu0 0.0
    %724 = vmatpush1.msra.mxu0 0.0
    %725 = vmatprep.subr.mxu0 0.0
    %726 = vmatpush1.msra.mxu0 0.0
    %727 = vmatprep.subr.mxu0 0.0
    %728 = vmatpush1.msra.mxu0 0.0
    %729 = vmatprep.subr.mxu0 0.0
    %730 = vmatpush1.msra.mxu0 0.0
    %731 = vmatprep.subr.mxu0 0.0
    %732 = vmatpush1.msra.mxu0 0.0
    %733 = vmatprep.subr.mxu0 0.0
    %734 = vmatpush1.msra.mxu0 0.0
    %735 = vmatprep.subr.mxu0 0.0
    %736 = vmatpush1.msra.mxu0 0.0
    %737 = vmatprep.subr.mxu0 0.0
    %738 = vmatpush1.msra.mxu0 0.0
    %739 = vmatprep.subr.mxu0 0.0
    %740 = vmatpush1.msra.mxu0 0.0
    %741 = vmatprep.subr.mxu0 0.0
    %742 = vmatpush1.msra.mxu0 0.0
    %743 = vmatprep.subr.mxu0 0.0
    %744 = vmatpush1.msra.mxu0 0.0
    %745 = vmatprep.subr.mxu0 0.0
    %746 = vmatpush1.msra.mxu0 0.0
    %747 = vmatprep.mubr.f32.mxu0 0.0
    %748 = vmatmul.mubr.f32.gmra.mrb[0].mxu0 %v681
    %v749 = vpop.f32.mrb[0].mxu0
    %v750 = vadd.f32 0.0, %v749
    %v751 = vpop.f32.mrb[0].mxu0
    %752 = vdwg.mxu0
    %v753 = vadd.f32 %v678, %v259
    %v754 = vmul.f32 %v251, %v750
    %v755 = vadd.f32 %v753, %v754
    %v756 = vtanh.pop %v755
    %v758 = vsel %vm280, %v756, 0
    %760 = vmatprep.subr.mxu0 0.0
    %761 = vmatpush1.msra.mxu0 %v354
    %762 = vmatprep.subr.mxu0 0.0
    %763 = vmatpush1.msra.mxu0 %v355
    %764 = vmatprep.subr.mxu0 0.0
    %765 = vmatpush1.msra.mxu0 %v356
    %766 = vmatprep.subr.mxu0 0.0
    %767 = vmatpush1.msra.mxu0 %v357
    %768 = vmatprep.subr.mxu0 0.0
    %769 = vmatpush1.msra.mxu0 0.0
    %770 = vmatprep.subr.mxu0 0.0
    %771 = vmatpush1.msra.mxu0 0.0
    %772 = vmatprep.subr.mxu0 0.0
    %773 = vmatpush1.msra.mxu0 0.0
    %774 = vmatprep.subr.mxu0 0.0
    %775 = vmatpush1.msra.mxu0 0.0
    %776 = vmatprep.subr.mxu0 0.0
    %777 = vmatpush1.msra.mxu0 0.0
    %778 = vmatprep.subr.mxu0 0.0
    %779 = vmatpush1.msra.mxu0 0.0
    %780 = vmatprep.subr.mxu0 0.0
    %781 = vmatpush1.msra.mxu0 0.0
    %782 = vmatprep.subr.mxu0 0.0
    %783 = vmatpush1.msra.mxu0 0.0
    %784 = vmatprep.subr.mxu0 0.0
    %785 = vmatpush1.msra.mxu0 0.0
    %786 = vmatprep.subr.mxu0 0.0
    %787 = vmatpush1.msra.mxu0 0.0
    %788 = vmatprep.subr.mxu0 0.0
    %789 = vmatpush1.msra.mxu0 0.0
    %790 = vmatprep.subr.mxu0 0.0
    %791 = vmatpush1.msra.mxu0 0.0
    %792 = vmatprep.subr.mxu0 0.0
    %793 = vmatpush1.msra.mxu0 0.0
    %794 = vmatprep.subr.mxu0 0.0
    %795 = vmatpush1.msra.mxu0 0.0
    %796 = vmatprep.subr.mxu0 0.0
    %797 = vmatpush1.msra.mxu0 0.0
    %798 = vmatprep.subr.mxu0 0.0
    %799 = vmatpush1.msra.mxu0 0.0
    %800 = vmatprep.subr.mxu0 0.0
    %801 = vmatpush1.msra.mxu0 0.0
    %802 = vmatprep.subr.mxu0 0.0
    %803 = vmatpush1.msra.mxu0 0.0
    %804 = vmatprep.subr.mxu0 0.0
    %805 = vmatpush1.msra.mxu0 0.0
    %806 = vmatprep.subr.mxu0 0.0
    %807 = vmatpush1.msra.mxu0 0.0
    %808 = vmatprep.subr.mxu0 0.0
    %809 = vmatpush1.msra.mxu0 0.0
    %810 = vmatprep.subr.mxu0 0.0
    %811 = vmatpush1.msra.mxu0 0.0
    %812 = vmatprep.subr.mxu0 0.0
    %813 = vmatpush1.msra.mxu0 0.0
    %814 = vmatprep.subr.mxu0 0.0
    %815 = vmatpush1.msra.mxu0 0.0
    %816 = vmatprep.subr.mxu0 0.0
    %817 = vmatpush1.msra.mxu0 0.0
    %818 = vmatprep.subr.mxu0 0.0
    %819 = vmatpush1.msra.mxu0 0.0
    %820 = vmatprep.subr.mxu0 0.0
    %821 = vmatpush1.msra.mxu0 0.0
    %822 = vmatprep.subr.mxu0 0.0
    %823 = vmatpush1.msra.mxu0 0.0
    %824 = vmatprep.mubr.f32.mxu0 0.0
    %825 = vmatmul.mubr.f32.gmra.mrb[0].mxu0 %v758
    %v826 = vpop.f32.mrb[0].mxu0
    %v827 = vadd.f32 0.0, %v826
    %v828 = vpop.f32.mrb[0].mxu0
    %829 = vdwg.mxu0
    %v830 = vmul.f32 %v251, %v827
    %v831 = vadd.f32 %v753, %v830
    %v832 = vtanh.pop %v831
    %v834 = vsel %vm280, %v832, 0
    %836 = vmatprep.subr.mxu0 0.0
    %837 = vmatpush1.msra.mxu0 %v354
    %838 = vmatprep.subr.mxu0 0.0
    %839 = vmatpush1.msra.mxu0 %v355
    %840 = vmatprep.subr.mxu0 0.0
    %841 = vmatpush1.msra.mxu0 %v356
    %842 = vmatprep.subr.mxu0 0.0
    %843 = vmatpush1.msra.mxu0 %v357
    %844 = vmatprep.subr.mxu0 0.0
    %845 = vmatpush1.msra.mxu0 0.0
    %846 = vmatprep.subr.mxu0 0.0
    %847 = vmatpush1.msra.mxu0 0.0
    %848 = vmatprep.subr.mxu0 0.0
    %849 = vmatpush1.msra.mxu0 0.0
    %850 = vmatprep.subr.mxu0 0.0
    %851 = vmatpush1.msra.mxu0 0.0
    %852 = vmatprep.subr.mxu0 0.0
    %853 = vmatpush1.msra.mxu0 0.0
    %854 = vmatprep.subr.mxu0 0.0
    %855 = vmatpush1.msra.mxu0 0.0
    %856 = vmatprep.subr.mxu0 0.0
    %857 = vmatpush1.msra.mxu0 0.0
    %858 = vmatprep.subr.mxu0 0.0
    %859 = vmatpush1.msra.mxu0 0.0
    %860 = vmatprep.subr.mxu0 0.0
    %861 = vmatpush1.msra.mxu0 0.0
    %862 = vmatprep.subr.mxu0 0.0
    %863 = vmatpush1.msra.mxu0 0.0
    %864 = vmatprep.subr.mxu0 0.0
    %865 = vmatpush1.msra.mxu0 0.0
    %866 = vmatprep.subr.mxu0 0.0
    %867 = vmatpush1.msra.mxu0 0.0
    %868 = vmatprep.subr.mxu0 0.0
    %869 = vmatpush1.msra.mxu0 0.0
    %870 = vmatprep.subr.mxu0 0.0
    %871 = vmatpush1.msra.mxu0 0.0
    %872 = vmatprep.subr.mxu0 0.0
    %873 = vmatpush1.msra.mxu0 0.0
    %874 = vmatprep.subr.mxu0 0.0
    %875 = vmatpush1.msra.mxu0 0.0
    %876 = vmatprep.subr.mxu0 0.0
    %877 = vmatpush1.msra.mxu0 0.0
    %878 = vmatprep.subr.mxu0 0.0
    %879 = vmatpush1.msra.mxu0 0.0
    %880 = vmatprep.subr.mxu0 0.0
    %881 = vmatpush1.msra.mxu0 0.0
    %882 = vmatprep.subr.mxu0 0.0
    %883 = vmatpush1.msra.mxu0 0.0
    %884 = vmatprep.subr.mxu0 0.0
    %885 = vmatpush1.msra.mxu0 0.0
    %886 = vmatprep.subr.mxu0 0.0
    %887 = vmatpush1.msra.mxu0 0.0
    %888 = vmatprep.subr.mxu0 0.0
    %889 = vmatpush1.msra.mxu0 0.0
    %890 = vmatprep.subr.mxu0 0.0
    %891 = vmatpush1.msra.mxu0 0.0
    %892 = vmatprep.subr.mxu0 0.0
    %893 = vmatpush1.msra.mxu0 0.0
    %894 = vmatprep.subr.mxu0 0.0
    %895 = vmatpush1.msra.mxu0 0.0
    %896 = vmatprep.subr.mxu0 0.0
    %897 = vmatpush1.msra.mxu0 0.0
    %898 = vmatprep.subr.mxu0 0.0
    %899 = vmatpush1.msra.mxu0 0.0
    %900 = vmatprep.mubr.f32.mxu0 0.0
    %901 = vmatmul.mubr.f32.gmra.mrb[0].mxu0 %v834
    %v902 = vpop.f32.mrb[0].mxu0
    %v903 = vadd.f32 0.0, %v902
    %v904 = vpop.f32.mrb[0].mxu0
    %905 = vdwg.mxu0
    %v906 = vadd.f32 %v678, %v265
    %v907 = vmul.f32 %v263, %v903
    %v908 = vadd.f32 %v906, %v907
    %v909 = vtanh.pop %v908
    %v910 = vmul.f32 %v756, 2.0
    %v911 = vadd.f32 %v679, %v910
    %v912 = vmul.f32 %v832, 2.0
    %v913 = vadd.f32 %v911, %v912
    %v914 = vadd.f32 %v913, %v909
    %v915 = vadd.f32 %v592, %v914
    %v917 = vsel %vm280, %v909, 0
    %919 = vmatprep.subr.mxu0 0.0
    %920 = vmatpush1.msra.mxu0 %v354
    %921 = vmatprep.subr.mxu0 0.0
    %922 = vmatpush1.msra.mxu0 %v355
    %923 = vmatprep.subr.mxu0 0.0
    %924 = vmatpush1.msra.mxu0 %v356
    %925 = vmatprep.subr.mxu0 0.0
    %926 = vmatpush1.msra.mxu0 %v357
    %927 = vmatprep.subr.mxu0 0.0
    %928 = vmatpush1.msra.mxu0 0.0
    %929 = vmatprep.subr.mxu0 0.0
    %930 = vmatpush1.msra.mxu0 0.0
    %931 = vmatprep.subr.mxu0 0.0
    %932 = vmatpush1.msra.mxu0 0.0
    %933 = vmatprep.subr.mxu0 0.0
    %934 = vmatpush1.msra.mxu0 0.0
    %935 = vmatprep.subr.mxu0 0.0
    %936 = vmatpush1.msra.mxu0 0.0
    %937 = vmatprep.subr.mxu0 0.0
    %938 = vmatpush1.msra.mxu0 0.0
    %939 = vmatprep.subr.mxu0 0.0
    %940 = vmatpush1.msra.mxu0 0.0
    %941 = vmatprep.subr.mxu0 0.0
    %942 = vmatpush1.msra.mxu0 0.0
    %943 = vmatprep.subr.mxu0 0.0
    %944 = vmatpush1.msra.mxu0 0.0
    %945 = vmatprep.subr.mxu0 0.0
    %946 = vmatpush1.msra.mxu0 0.0
    %947 = vmatprep.subr.mxu0 0.0
    %948 = vmatpush1.msra.mxu0 0.0
    %949 = vmatprep.subr.mxu0 0.0
    %950 = vmatpush1.msra.mxu0 0.0
    %951 = vmatprep.subr.mxu0 0.0
    %952 = vmatpush1.msra.mxu0 0.0
    %953 = vmatprep.subr.mxu0 0.0
    %954 = vmatpush1.msra.mxu0 0.0
    %955 = vmatprep.subr.mxu0 0.0
    %956 = vmatpush1.msra.mxu0 0.0
    %957 = vmatprep.subr.mxu0 0.0
    %958 = vmatpush1.msra.mxu0 0.0
    %959 = vmatprep.subr.mxu0 0.0
    %960 = vmatpush1.msra.mxu0 0.0
    %961 = vmatprep.subr.mxu0 0.0
    %962 = vmatpush1.msra.mxu0 0.0
    %963 = vmatprep.subr.mxu0 0.0
    %964 = vmatpush1.msra.mxu0 0.0
    %965 = vmatprep.subr.mxu0 0.0
    %966 = vmatpush1.msra.mxu0 0.0
    %967 = vmatprep.subr.mxu0 0.0
    %968 = vmatpush1.msra.mxu0 0.0
    %969 = vmatprep.subr.mxu0 0.0
    %970 = vmatpush1.msra.mxu0 0.0
    %971 = vmatprep.subr.mxu0 0.0
    %972 = vmatpush1.msra.mxu0 0.0
    %973 = vmatprep.subr.mxu0 0.0
    %974 = vmatpush1.msra.mxu0 0.0
    %975 = vmatprep.subr.mxu0 0.0
    %976 = vmatpush1.msra.mxu0 0.0
    %977 = vmatprep.subr.mxu0 0.0
    %978 = vmatpush1.msra.mxu0 0.0
    %979 = vmatprep.subr.mxu0 0.0
    %980 = vmatpush1.msra.mxu0 0.0
    %981 = vmatprep.subr.mxu0 0.0
    %982 = vmatpush1.msra.mxu0 0.0
    %983 = vmatprep.mubr.f32.mxu0 0.0
    %984 = vmatmul.mubr.f32.gmra.mrb[0].mxu0 %v917
    %v985 = vpop.f32.mrb[0].mxu0
    %v986 = vadd.f32 0.0, %v985
    %v987 = vpop.f32.mrb[0].mxu0
    %988 = vdwg.mxu0
    %v989 = vmul.f32 %v827, 2.0
    %v990 = vadd.f32 %v750, %v989
    %v991 = vmul.f32 %v903, 2.0
    %v992 = vadd.f32 %v990, %v991
    %v993 = vadd.f32 %v992, %v986
    %v994 = vmul.f32 %v674, %v993
    %v995 = vadd.f32 %v678, %v994
    %v996 = vadd.f32 %v995, %v265
    %v997 = vtanh.pop %v996
    %v999 = vsel %vm280, %v997, 0
    %1001 = vmatprep.subr.mxu0 0.0
    %1002 = vmatpush1.msra.mxu0 %v354
    %1003 = vmatprep.subr.mxu0 0.0
    %1004 = vmatpush1.msra.mxu0 %v355
    %1005 = vmatprep.subr.mxu0 0.0
    %1006 = vmatpush1.msra.mxu0 %v356
    %1007 = vmatprep.subr.mxu0 0.0
    %1008 = vmatpush1.msra.mxu0 %v357
    %1009 = vmatprep.subr.mxu0 0.0
    %1010 = vmatpush1.msra.mxu0 0.0
    %1011 = vmatprep.subr.mxu0 0.0
    %1012 = vmatpush1.msra.mxu0 0.0
    %1013 = vmatprep.subr.mxu0 0.0
    %1014 = vmatpush1.msra.mxu0 0.0
    %1015 = vmatprep.subr.mxu0 0.0
    %1016 = vmatpush1.msra.mxu0 0.0
    %1017 = vmatprep.subr.mxu0 0.0
    %1018 = vmatpush1.msra.mxu0 0.0
    %1019 = vmatprep.subr.mxu0 0.0
    %1020 = vmatpush1.msra.mxu0 0.0
    %1021 = vmatprep.subr.mxu0 0.0
    %1022 = vmatpush1.msra.mxu0 0.0
    %1023 = vmatprep.subr.mxu0 0.0
    %1024 = vmatpush1.msra.mxu0 0.0
    %1025 = vmatprep.subr.mxu0 0.0
    %1026 = vmatpush1.msra.mxu0 0.0
    %1027 = vmatprep.subr.mxu0 0.0
    %1028 = vmatpush1.msra.mxu0 0.0
    %1029 = vmatprep.subr.mxu0 0.0
    %1030 = vmatpush1.msra.mxu0 0.0
    %1031 = vmatprep.subr.mxu0 0.0
    %1032 = vmatpush1.msra.mxu0 0.0
    %1033 = vmatprep.subr.mxu0 0.0
    %1034 = vmatpush1.msra.mxu0 0.0
    %1035 = vmatprep.subr.mxu0 0.0
    %1036 = vmatpush1.msra.mxu0 0.0
    %1037 = vmatprep.subr.mxu0 0.0
    %1038 = vmatpush1.msra.mxu0 0.0
    %1039 = vmatprep.subr.mxu0 0.0
    %1040 = vmatpush1.msra.mxu0 0.0
    %1041 = vmatprep.subr.mxu0 0.0
    %1042 = vmatpush1.msra.mxu0 0.0
    %1043 = vmatprep.subr.mxu0 0.0
    %1044 = vmatpush1.msra.mxu0 0.0
    %1045 = vmatprep.subr.mxu0 0.0
    %1046 = vmatpush1.msra.mxu0 0.0
    %1047 = vmatprep.subr.mxu0 0.0
    %1048 = vmatpush1.msra.mxu0 0.0
    %1049 = vmatprep.subr.mxu0 0.0
    %1050 = vmatpush1.msra.mxu0 0.0
    %1051 = vmatprep.subr.mxu0 0.0
    %1052 = vmatpush1.msra.mxu0 0.0
    %1053 = vmatprep.subr.mxu0 0.0
    %1054 = vmatpush1.msra.mxu0 0.0
    %1055 = vmatprep.subr.mxu0 0.0
    %1056 = vmatpush1.msra.mxu0 0.0
    %1057 = vmatprep.subr.mxu0 0.0
    %1058 = vmatpush1.msra.mxu0 0.0
    %1059 = vmatprep.subr.mxu0 0.0
    %1060 = vmatpush1.msra.mxu0 0.0
    %1061 = vmatprep.subr.mxu0 0.0
    %1062 = vmatpush1.msra.mxu0 0.0
    %1063 = vmatprep.subr.mxu0 0.0
    %1064 = vmatpush1.msra.mxu0 0.0
    %1065 = vmatprep.mubr.f32.mxu0 0.0
    %1066 = vmatmul.mubr.f32.gmra.mrb[0].mxu0 %v999
    %v1067 = vpop.f32.mrb[0].mxu0
    %v1068 = vadd.f32 0.0, %v1067
    %v1069 = vpop.f32.mrb[0].mxu0
    %1070 = vdwg.mxu0
    %v1071 = vadd.f32 %v996, %v259
    %v1072 = vmul.f32 %v251, %v1068
    %v1073 = vadd.f32 %v1071, %v1072
    %v1074 = vtanh.pop %v1073
    %v1076 = vsel %vm280, %v1074, 0
    %1078 = vmatprep.subr.mxu0 0.0
    %1079 = vmatpush1.msra.mxu0 %v354
    %1080 = vmatprep.subr.mxu0 0.0
    %1081 = vmatpush1.msra.mxu0 %v355
    %1082 = vmatprep.subr.mxu0 0.0
    %1083 = vmatpush1.msra.mxu0 %v356
    %1084 = vmatprep.subr.mxu0 0.0
    %1085 = vmatpush1.msra.mxu0 %v357
    %1086 = vmatprep.subr.mxu0 0.0
    %1087 = vmatpush1.msra.mxu0 0.0
    %1088 = vmatprep.subr.mxu0 0.0
    %1089 = vmatpush1.msra.mxu0 0.0
    %1090 = vmatprep.subr.mxu0 0.0
    %1091 = vmatpush1.msra.mxu0 0.0
    %1092 = vmatprep.subr.mxu0 0.0
    %1093 = vmatpush1.msra.mxu0 0.0
    %1094 = vmatprep.subr.mxu0 0.0
    %1095 = vmatpush1.msra.mxu0 0.0
    %1096 = vmatprep.subr.mxu0 0.0
    %1097 = vmatpush1.msra.mxu0 0.0
    %1098 = vmatprep.subr.mxu0 0.0
    %1099 = vmatpush1.msra.mxu0 0.0
    %1100 = vmatprep.subr.mxu0 0.0
    %1101 = vmatpush1.msra.mxu0 0.0
    %1102 = vmatprep.subr.mxu0 0.0
    %1103 = vmatpush1.msra.mxu0 0.0
    %1104 = vmatprep.subr.mxu0 0.0
    %1105 = vmatpush1.msra.mxu0 0.0
    %1106 = vmatprep.subr.mxu0 0.0
    %1107 = vmatpush1.msra.mxu0 0.0
    %1108 = vmatprep.subr.mxu0 0.0
    %1109 = vmatpush1.msra.mxu0 0.0
    %1110 = vmatprep.subr.mxu0 0.0
    %1111 = vmatpush1.msra.mxu0 0.0
    %1112 = vmatprep.subr.mxu0 0.0
    %1113 = vmatpush1.msra.mxu0 0.0
    %1114 = vmatprep.subr.mxu0 0.0
    %1115 = vmatpush1.msra.mxu0 0.0
    %1116 = vmatprep.subr.mxu0 0.0
    %1117 = vmatpush1.msra.mxu0 0.0
    %1118 = vmatprep.subr.mxu0 0.0
    %1119 = vmatpush1.msra.mxu0 0.0
    %1120 = vmatprep.subr.mxu0 0.0
    %1121 = vmatpush1.msra.mxu0 0.0
    %1122 = vmatprep.subr.mxu0 0.0
    %1123 = vmatpush1.msra.mxu0 0.0
    %1124 = vmatprep.subr.mxu0 0.0
    %1125 = vmatpush1.msra.mxu0 0.0
    %1126 = vmatprep.subr.mxu0 0.0
    %1127 = vmatpush1.msra.mxu0 0.0
    %1128 = vmatprep.subr.mxu0 0.0
    %1129 = vmatpush1.msra.mxu0 0.0
    %1130 = vmatprep.subr.mxu0 0.0
    %1131 = vmatpush1.msra.mxu0 0.0
    %1132 = vmatprep.subr.mxu0 0.0
    %1133 = vmatpush1.msra.mxu0 0.0
    %1134 = vmatprep.subr.mxu0 0.0
    %1135 = vmatpush1.msra.mxu0 0.0
    %1136 = vmatprep.subr.mxu0 0.0
    %1137 = vmatpush1.msra.mxu0 0.0
    %1138 = vmatprep.subr.mxu0 0.0
    %1139 = vmatpush1.msra.mxu0 0.0
    %1140 = vmatprep.subr.mxu0 0.0
    %1141 = vmatpush1.msra.mxu0 0.0
    %1142 = vmatprep.mubr.f32.mxu0 0.0
    %1143 = vmatmul.mubr.f32.gmra.mrb[0].mxu0 %v1076
    %v1144 = vpop.f32.mrb[0].mxu0
    %v1145 = vadd.f32 0.0, %v1144
    %v1146 = vpop.f32.mrb[0].mxu0
    %1147 = vdwg.mxu0
    %v1148 = vmul.f32 %v251, %v1145
    %v1149 = vadd.f32 %v1071, %v1148
    %v1150 = vtanh.pop %v1149
    %v1152 = vsel %vm280, %v1150, 0
    %1154 = vmatprep.subr.mxu0 0.0
    %1155 = vmatpush1.msra.mxu0 %v354
    %1156 = vmatprep.subr.mxu0 0.0
    %1157 = vmatpush1.msra.mxu0 %v355
    %1158 = vmatprep.subr.mxu0 0.0
    %1159 = vmatpush1.msra.mxu0 %v356
    %1160 = vmatprep.subr.mxu0 0.0
    %1161 = vmatpush1.msra.mxu0 %v357
    %1162 = vmatprep.subr.mxu0 0.0
    %1163 = vmatpush1.msra.mxu0 0.0
    %1164 = vmatprep.subr.mxu0 0.0
    %1165 = vmatpush1.msra.mxu0 0.0
    %1166 = vmatprep.subr.mxu0 0.0
    %1167 = vmatpush1.msra.mxu0 0.0
    %1168 = vmatprep.subr.mxu0 0.0
    %1169 = vmatpush1.msra.mxu0 0.0
    %1170 = vmatprep.subr.mxu0 0.0
    %1171 = vmatpush1.msra.mxu0 0.0
    %1172 = vmatprep.subr.mxu0 0.0
    %1173 = vmatpush1.msra.mxu0 0.0
    %1174 = vmatprep.subr.mxu0 0.0
    %1175 = vmatpush1.msra.mxu0 0.0
    %1176 = vmatprep.subr.mxu0 0.0
    %1177 = vmatpush1.msra.mxu0 0.0
    %1178 = vmatprep.subr.mxu0 0.0
    %1179 = vmatpush1.msra.mxu0 0.0
    %1180 = vmatprep.subr.mxu0 0.0
    %1181 = vmatpush1.msra.mxu0 0.0
    %1182 = vmatprep.subr.mxu0 0.0
    %1183 = vmatpush1.msra.mxu0 0.0
    %1184 = vmatprep.subr.mxu0 0.0
    %1185 = vmatpush1.msra.mxu0 0.0
    %1186 = vmatprep.subr.mxu0 0.0
    %1187 = vmatpush1.msra.mxu0 0.0
    %1188 = vmatprep.subr.mxu0 0.0
    %1189 = vmatpush1.msra.mxu0 0.0
    %1190 = vmatprep.subr.mxu0 0.0
    %1191 = vmatpush1.msra.mxu0 0.0
    %1192 = vmatprep.subr.mxu0 0.0
    %1193 = vmatpush1.msra.mxu0 0.0
    %1194 = vmatprep.subr.mxu0 0.0
    %1195 = vmatpush1.msra.mxu0 0.0
    %1196 = vmatprep.subr.mxu0 0.0
    %1197 = vmatpush1.msra.mxu0 0.0
    %1198 = vmatprep.subr.mxu0 0.0
    %1199 = vmatpush1.msra.mxu0 0.0
    %1200 = vmatprep.subr.mxu0 0.0
    %1201 = vmatpush1.msra.mxu0 0.0
    %1202 = vmatprep.subr.mxu0 0.0
    %1203 = vmatpush1.msra.mxu0 0.0
    %1204 = vmatprep.subr.mxu0 0.0
    %1205 = vmatpush1.msra.mxu0 0.0
    %1206 = vmatprep.subr.mxu0 0.0
    %1207 = vmatpush1.msra.mxu0 0.0
    %1208 = vmatprep.subr.mxu0 0.0
    %1209 = vmatpush1.msra.mxu0 0.0
    %1210 = vmatprep.subr.mxu0 0.0
    %1211 = vmatpush1.msra.mxu0 0.0
    %1212 = vmatprep.subr.mxu0 0.0
    %1213 = vmatpush1.msra.mxu0 0.0
    %1214 = vmatprep.subr.mxu0 0.0
    %1215 = vmatpush1.msra.mxu0 0.0
    %1216 = vmatprep.subr.mxu0 0.0
    %1217 = vmatpush1.msra.mxu0 0.0
    %1218 = vmatprep.mubr.f32.mxu0 0.0
    %1219 = vmatmul.mubr.f32.gmra.mrb[0].mxu0 %v1152
    %v1220 = vpop.f32.mrb[0].mxu0
    %v1221 = vadd.f32 0.0, %v1220
    %v1222 = vpop.f32.mrb[0].mxu0
    %1223 = vdwg.mxu0
    %v1224 = vadd.f32 %v996, %v265
    %v1225 = vmul.f32 %v263, %v1221
    %v1226 = vadd.f32 %v1224, %v1225
    %v1227 = vtanh.pop %v1226
    %v1228 = vmul.f32 %v1074, 2.0
    %v1229 = vadd.f32 %v997, %v1228
    %v1230 = vmul.f32 %v1150, 2.0
    %v1231 = vadd.f32 %v1229, %v1230
    %v1232 = vadd.f32 %v1231, %v1227
    %v1233 = vadd.f32 %v915, %v1232
    %v1234 = vld [vmem:[%s8] sm:$0xff]
    %v1235 = vld [vmem:[%s8 + $0x8] sm:$0xff]
    %v1236 = vld [vmem:[%s8 + $0x10] sm:$0xff]
    %v1237 = vld [vmem:[%s8 + $0x18] sm:$0xff]
    %v1239 = vsel %vm280, %v1233, 0
    %1241 = vmatprep.subr.mxu0 0.0
    %1242 = vmatpush1.msra.mxu0 %v1234
    %1243 = vmatprep.subr.mxu0 0.0
    %1244 = vmatpush1.msra.mxu0 %v1235
    %1245 = vmatprep.subr.mxu0 0.0
    %1246 = vmatpush1.msra.mxu0 %v1236
    %1247 = vmatprep.subr.mxu0 0.0
    %1248 = vmatpush1.msra.mxu0 %v1237
    %1249 = vmatprep.subr.mxu0 0.0
    %1250 = vmatpush1.msra.mxu0 0.0
    %1251 = vmatprep.subr.mxu0 0.0
    %1252 = vmatpush1.msra.mxu0 0.0
    %1253 = vmatprep.subr.mxu0 0.0
    %1254 = vmatpush1.msra.mxu0 0.0
    %1255 = vmatprep.subr.mxu0 0.0
    %1256 = vmatpush1.msra.mxu0 0.0
    %1257 = vmatprep.subr.mxu0 0.0
    %1258 = vmatpush1.msra.mxu0 0.0
    %1259 = vmatprep.subr.mxu0 0.0
    %1260 = vmatpush1.msra.mxu0 0.0
    %1261 = vmatprep.subr.mxu0 0.0
    %1262 = vmatpush1.msra.mxu0 0.0
    %1263 = vmatprep.subr.mxu0 0.0
    %1264 = vmatpush1.msra.mxu0 0.0
    %1265 = vmatprep.subr.mxu0 0.0
    %1266 = vmatpush1.msra.mxu0 0.0
    %1267 = vmatprep.subr.mxu0 0.0
    %1268 = vmatpush1.msra.mxu0 0.0
    %1269 = vmatprep.subr.mxu0 0.0
    %1270 = vmatpush1.msra.mxu0 0.0
    %1271 = vmatprep.subr.mxu0 0.0
    %1272 = vmatpush1.msra.mxu0 0.0
    %1273 = vmatprep.subr.mxu0 0.0
    %1274 = vmatpush1.msra.mxu0 0.0
    %1275 = vmatprep.subr.mxu0 0.0
    %1276 = vmatpush1.msra.mxu0 0.0
    %1277 = vmatprep.subr.mxu0 0.0
    %1278 = vmatpush1.msra.mxu0 0.0
    %1279 = vmatprep.subr.mxu0 0.0
    %1280 = vmatpush1.msra.mxu0 0.0
    %1281 = vmatprep.subr.mxu0 0.0
    %1282 = vmatpush1.msra.mxu0 0.0
    %1283 = vmatprep.subr.mxu0 0.0
    %1284 = vmatpush1.msra.mxu0 0.0
    %1285 = vmatprep.subr.mxu0 0.0
    %1286 = vmatpush1.msra.mxu0 0.0
    %1287 = vmatprep.subr.mxu0 0.0
    %1288 = vmatpush1.msra.mxu0 0.0
    %1289 = vmatprep.subr.mxu0 0.0
    %1290 = vmatpush1.msra.mxu0 0.0
    %1291 = vmatprep.subr.mxu0 0.0
    %1292 = vmatpush1.msra.mxu0 0.0
    %1293 = vmatprep.subr.mxu0 0.0
    %1294 = vmatpush1.msra.mxu0 0.0
    %1295 = vmatprep.subr.mxu0 0.0
    %1296 = vmatpush1.msra.mxu0 0.0
    %1297 = vmatprep.subr.mxu0 0.0
    %1298 = vmatpush1.msra.mxu0 0.0
    %1299 = vmatprep.subr.mxu0 0.0
    %1300 = vmatpush1.msra.mxu0 0.0
    %1301 = vmatprep.subr.mxu0 0.0
    %1302 = vmatpush1.msra.mxu0 0.0
    %1303 = vmatprep.subr.mxu0 0.0
    %1304 = vmatpush1.msra.mxu0 0.0
    %1305 = vmatprep.mubr.f32.mxu0 0.0
    %1306 = vmatmul.mubr.f32.gmra.mrb[0].mxu0 %v1239
    %v1307 = vpop.f32.mrb[0].mxu0
    %v1308 = vadd.f32 0.0, %v1307
    %v1309 = vpop.f32.mrb[0].mxu0
    %1310 = vdwg.mxu0
    %v1311 = vmul.f32 %v674, %v1308
    %1313 = vrot.lane.b32.xlu0 %v1311, 96
    %v1314 = vpop.permute.xlu0 %1313
    %v1316 = vadd.f32 %v243, %v1314
    %v1317 = vmul.f32 %v244, 3.0
    %v1318 = vld [vmem:[%s9] sm:$0x1]
    %1320 = vset.pattern.permute.xlu0 0
    %1321 = vperm.xlu0 %1320, %v1317
    %v1322 = vpop.permute.xlu0 %1321
    %v1325 = vlaneseq
    %v1326 = vshrl.u32 %v1325, 7
    %v1327 = vsub.s32 0, %v1326
    %v1328 = vrot.slane %v1318, %v1327
    %v1330 = vmul.f32 %v1322, %v1328
    %1332 = vrot.lane.b32.xlu0 %v1330, 96
    %v1333 = vpop.permute.xlu0 %1332
    %v1335 = vadd.f32 %v1316, %v1333
    %1337 = vrot.lane.b32.xlu0 %v1335, 32
    %v1338 = vpop.permute.xlu0 %1337
    %1340 = vst.msk [vmem:[#allocation13] sm:$0xff] %vm280, %v1338
    %1342 = vrot.lane.b32.xlu0 %v237, 96
    %v1343 = vpop.permute.xlu0 %1342
    %1345 = vst.msk [vmem:[#allocation14] sm:$0xff] %vm280, %v1343
    // Predicated region
    $region74: #{tpu_custom_call.1} parent=1 // pred_check
      _
    $region75: #{tpu_custom_call.1} parent=1 // pred_check_branch
      %1347 = sbr.rel (0) target = $region77
    $region76: #{tpu_custom_call.1} parent=1 // pred_region
      %s1349 = ssub.s32 128, 128
      %1350 = vsyncadd [#allocation4], %s1349
      %s1352 = sshll.u32 [#allocation13], 4
      %s1353 = int_to_ptr.vmem [resolvable:$true] %s1352
      %1355 = dma.vmem_to_hbm [thread:$0]  %s1353, 128, %s12, [#allocation4]
    $region77: #{tpu_custom_call.1} parent=1 // pred_fallthru
      _
    // Predicated region
    $region78: #{tpu_custom_call.1} parent=1 // pred_check
      _
    $region79: #{tpu_custom_call.1} parent=1 // pred_check_branch
      %1357 = sbr.rel (0) target = $region81
    $region80: #{tpu_custom_call.1} parent=1 // pred_region
      %s1359 = ssub.s32 128, 128
      %1360 = vsyncadd [#allocation15], %s1359
      %s1362 = sshll.u32 [#allocation14], 4
      %s1363 = int_to_ptr.vmem [resolvable:$true] %s1362
      %1365 = dma.vmem_to_hbm [thread:$0]  %s1363, 128, %s13, [#allocation15]
    $region81: #{tpu_custom_call.1} parent=1 // pred_fallthru
      _
    // Predicated region
    $region82: #{tpu_custom_call.1} parent=1 // pred_check
      _
    $region83: #{tpu_custom_call.1} parent=1 // pred_check_branch
      %1367 = sbr.rel (0) target = $region85
    $region84: #{tpu_custom_call.1} parent=1 // pred_region
      %1368 = dma.done [#allocation4], 128
    $region85: #{tpu_custom_call.1} parent=1 // pred_fallthru
      _
    // Predicated region
    $region86: #{tpu_custom_call.1} parent=1 // pred_check
      _
    $region87: #{tpu_custom_call.1} parent=1 // pred_check_branch
      %1370 = sbr.rel (0) target = $region89
    $region88: #{tpu_custom_call.1} parent=1 // pred_region
      %1371 = dma.done [#allocation15], 128
    $region89: #{tpu_custom_call.1} parent=1 // pred_fallthru
      _
    %1372 = vsyncpa [#allocation3], 1
    %1373 = vsyncpa [#allocation6], 1
    %1374 = vsyncpa [#allocation9], 1
    %1375 = vsyncpa [#allocation12], 1
    %1376 = vsyncpa [#allocation4], 1
    %1377 = vsyncpa [#allocation15], 1

</llo_original>
